<compile_context>
chip_gen: v5e
topology: v5e:2x2
jax: 0.10.0
libtpu: 0.0.40
codegen_flags: <defaults>
</compile_context>

<pallas_src>
import numpy as np
import jax
import jax.numpy as jnp
from jax.experimental import pallas as pl
from jax.experimental.pallas import tpu as pltpu


def _transition_kernel(x_ref, scale_ref, bias_ref, w_ref, o_ref):
    # x_ref:     (Th, 2, Wo, 2*Cp)  bf16  (H-pair axis explicit, W-pair packed into lanes)
    # scale_ref: (1, 2*Cp)          f32   folded BN scale, duplicated over the W-pair
    # bias_ref:  (1, 2*Cp)          f32   folded BN bias,  duplicated over the W-pair
    # w_ref:     (Cp, Cop)          bf16  1x1-conv weight, 0.25 avg-pool scale folded in
    # o_ref:     (Th, Wo, Cop)      out dtype (bf16 by default)
    scale = scale_ref[...]
    bias = bias_ref[...]
    x = x_ref[...]
    # BatchNorm2d (eval, folded) + ReLU in f32 on the VPU, summing the H-pair directly so
    # the full (Th, 2, Wo, 2Cp) post-BN tensor never exists as a live temporary.
    s = (jnp.maximum(x[:, 0].astype(jnp.float32) * scale + bias, 0.0) +
         jnp.maximum(x[:, 1].astype(jnp.float32) * scale + bias, 0.0))   # (Th, Wo, 2*Cp)
    # Finish the 2x2 sum-pool: add the two lane-aligned halves of the minor dim.
    cp = s.shape[-1] // 2
    p = s[..., :cp] + s[..., cp:]                                        # (Th, Wo, Cp)
    th, wo, _ = p.shape
    # 1x1 conv == channel matmul on the MXU; bf16 operands, f32 accumulation.
    acc = jnp.dot(p.reshape(th * wo, cp).astype(jnp.bfloat16), w_ref[...],
                  preferred_element_type=jnp.float32)                    # (Th*Wo, Cop)
    o_ref[...] = acc.reshape(th, wo, -1).astype(o_ref.dtype)


def _round_up(x, m):
    return (x + m - 1) // m * m


def _vmem_capacity_bytes():
    try:
        return int(pltpu.get_tpu_info().vmem_capacity_bytes)
    except Exception:
        return 64 << 20          # conservative fallback: v7x per-core VMEM


def _block_footprint_bytes(t, Wo, Cp, Cop, x_bytes, o_bytes):
    """Double-buffered in/out blocks + in-kernel f32 temporaries + constant operands."""
    x_blk = t * 2 * Wo * 2 * Cp * x_bytes
    o_blk = t * Wo * Cop * o_bytes
    # f32 temporaries the body materializes (two BN'ed halves + s, p, acc, bf16 copy of p).
    tmp = 3 * t * Wo * 2 * Cp * 4 + t * Wo * Cop * 4 + t * Wo * Cp * (4 + 2)
    const = 2 * (2 * Cp) * 4 + Cp * Cop * 2
    return 2 * (x_blk + o_blk) + tmp + const


def _pick_tile_ho(B, Ho, Wo, Cp, Cop, x_bytes, o_bytes, budget,
                  target_x_block_bytes=4 << 20):
    """Largest divisor of Ho whose (double-buffered + temporaries) footprint fits the
    budget; stop growing once the input block reaches ~4 MiB (enough to sit at the top
    of the HBM-bandwidth curve on all generations)."""
    best = 1
    for t in range(1, Ho + 1):
        if Ho % t:
            continue
        if _block_footprint_bytes(t, Wo, Cp, Cop, x_bytes, o_bytes) > budget:
            break
        best = t
        if t * 2 * Wo * 2 * Cp * x_bytes >= target_x_block_bytes:
            break
    # v7x shards the 'parallel' grid axes across its 2 TensorCores: with B == 1 keep at
    # least 2 spatial steps so one core is not left idle (no effect on v5e/v6e).
    if B == 1 and Ho // best < 2 and Ho >= 2:
        for t in range(Ho // 2, 0, -1):
            if Ho % t == 0:
                best = min(best, t)
                break
    return best


def transition_layer_nhwc(x_nhwc, gamma, beta, running_mean, running_var, conv_w,
                          eps=1e-5, out_dtype=jnp.bfloat16):
    """BN(eval) -> ReLU -> 1x1 conv -> 2x2 avg-pool.  NHWC in / NHWC out (preferred path)."""
    B, H, W, Cin = x_nhwc.shape
    Cout = conv_w.shape[0]
    assert H % 2 == 0 and W % 2 == 0, "even H/W required"
    # TODO(synk): odd H/W (PyTorch AvgPool2d floor) would need cropping the last row/col.
    Ho, Wo = H // 2, W // 2

    LANE = 128
    Cp = _round_up(Cin, LANE)      # padded input channels (lane-dense BN/ReLU, MXU K)
    Cop = _round_up(Cout, LANE)    # padded output channels (lane-dense stores)

    # Fold BatchNorm (inference semantics: running stats) into per-channel scale/bias.
    scale = gamma.astype(jnp.float32) / jnp.sqrt(running_var.astype(jnp.float32) + eps)
    bias = beta.astype(jnp.float32) - running_mean.astype(jnp.float32) * scale
    if Cp != Cin:
        scale = jnp.pad(scale, (0, Cp - Cin))
        bias = jnp.pad(bias, (0, Cp - Cin))
    scale2 = jnp.concatenate([scale, scale]).reshape(1, 2 * Cp)   # duplicated over W-pair
    bias2 = jnp.concatenate([bias, bias]).reshape(1, 2 * Cp)

    # 1x1 conv weight (Cin, Cout) with the 0.25 avg-pool scale folded in (exact in bf16),
    # zero rows/cols for padded channels.
    w = conv_w.reshape(Cout, Cin).T.astype(jnp.float32) * 0.25
    w = jnp.pad(w, ((0, Cp - Cin), (0, Cop - Cout))).astype(jnp.bfloat16)

    # bf16 activations (halves the dominant HBM read), pad channels, and expose the 2x2
    # pool structure as (B, Ho, 2, Wo, 2*Cp) -- a pure row-major view of NHWC.
    x = x_nhwc.astype(jnp.bfloat16)
    if Cp != Cin:
        x = jnp.pad(x, ((0, 0), (0, 0), (0, 0), (0, Cp - Cin)))
    x5 = x.reshape(B, Ho, 2, Wo, 2 * Cp)

    x_bytes, o_bytes = 2, jnp.dtype(out_dtype).itemsize
    vmem_cap = _vmem_capacity_bytes()
    budget = min(vmem_cap // 2, 48 << 20)          # ~32 MiB on v7x, 48 MiB on v5e/v6e
    tile_ho = _pick_tile_ho(B, Ho, Wo, Cp, Cop, x_bytes, o_bytes, budget)
    footprint = _block_footprint_bytes(tile_ho, Wo, Cp, Cop, x_bytes, o_bytes)
    vmem_limit = int(min(vmem_cap * 3 // 4, max(footprint * 13 // 10, 32 << 20)))

    def run(const_pipeline_mode):
        const_kw = ({} if const_pipeline_mode is None
                    else {"pipeline_mode": const_pipeline_mode})
        return pl.pallas_call(
            _transition_kernel,
            out_shape=jax.ShapeDtypeStruct((B, Ho, Wo, Cop), out_dtype),
            grid_spec=pltpu.PrefetchScalarGridSpec(
                num_scalar_prefetch=0,
                grid=(B, Ho // tile_ho),
                in_specs=[
                    pl.BlockSpec((None, tile_ho, 2, Wo, 2 * Cp),
                                 lambda b, h: (b, h, 0, 0, 0)),
                    pl.BlockSpec((1, 2 * Cp), lambda b, h: (0, 0), **const_kw),
                    pl.BlockSpec((1, 2 * Cp), lambda b, h: (0, 0), **const_kw),
                    pl.BlockSpec((Cp, Cop), lambda b, h: (0, 0), **const_kw),
                ],
                out_specs=pl.BlockSpec((None, tile_ho, Wo, Cop),
                                       lambda b, h: (b, h, 0, 0)),
            ),
            compiler_params=pltpu.CompilerParams(
                dimension_semantics=("parallel", "parallel"),
                vmem_limit_bytes=vmem_limit),
        )(x5, scale2, bias2, w)

    try:
        # Grid-constant operands single-buffered (frees ~Cp*Cop*2 bytes, nice on v7x).
        out = run(pl.Buffered(1))
    except Exception:
        out = run(None)   # installed JAX rejects pipeline_mode: default double-buffering

    return out if Cop == Cout else out[..., :Cout]


def transition_layer(x_nchw, gamma, beta, running_mean, running_var, conv_w,
                     eps=1e-5, out_dtype=jnp.bfloat16):
    """Pallas implementation of _TransitionLayer.forward (BatchNorm in eval mode).
    NCHW in / NCHW out for parity with the PyTorch module interface."""
    # TODO(synk): keep activations NHWC end-to-end in the surrounding model and call
    # transition_layer_nhwc directly; these transposes are pure layout plumbing that add
    # extra HBM passes around an otherwise single-pass, bandwidth-bound kernel.
    x_nhwc = jnp.transpose(x_nchw, (0, 2, 3, 1))
    out_nhwc = transition_layer_nhwc(x_nhwc, gamma, beta, running_mean, running_var,
                                     conv_w, eps=eps, out_dtype=out_dtype)
    return jnp.transpose(out_nhwc, (0, 3, 1, 2))


def _reference(x, gamma, beta, mean, var, conv_w, eps=1e-5):
    # Pure-JAX f32 reference matching PyTorch eval-mode semantics.
    inv = 1.0 / jnp.sqrt(var + eps)
    xb = (x - mean[None, :, None, None]) * (gamma * inv)[None, :, None, None] \
         + beta[None, :, None, None]
    xr = jnp.maximum(xb, 0.0)
    w2 = conv_w.reshape(conv_w.shape[0], conv_w.shape[1])     # (Cout, Cin)
    z = jnp.einsum('bchw,oc->bohw', xr, w2)                   # 1x1 conv, no bias
    B, Co, H, W = z.shape
    return z.reshape(B, Co, H // 2, 2, W // 2, 2).mean(axis=(3, 5))


if __name__ == "__main__":
    key = jax.random.PRNGKey(0)
    kx, kg, kb, km, kv, kw = jax.random.split(key, 6)

    B, Cin, H, W = 2, 4, 16, 16
    Cout = 2

    x = jax.random.normal(kx, (B, Cin, H, W), jnp.float32)
    gamma = 1.0 + 0.1 * jax.random.normal(kg, (Cin,), jnp.float32)
    beta = 0.1 * jax.random.normal(kb, (Cin,), jnp.float32)
    running_mean = 0.1 * jax.random.normal(km, (Cin,), jnp.float32)
    running_var = jax.random.uniform(kv, (Cin,), jnp.float32, 0.5, 1.5)
    conv_w = 0.1 * jax.random.normal(kw, (Cout, Cin, 1, 1), jnp.float32)

    out = transition_layer(x, gamma, beta, running_mean, running_var, conv_w)
    out = jax.block_until_ready(out)

    ref = _reference(x, gamma, beta, running_mean, running_var, conv_w)
    assert out.shape == (B, Cout, H // 2, W // 2), out.shape
    # Tolerance accounts for bf16 activations / weights / output (f32 accumulation).
    np.testing.assert_allclose(np.asarray(out.astype(jnp.float32)), np.asarray(ref),
                               rtol=2e-2, atol=2e-2)
    print("KERNEL_OK")
</pallas_src>

<mosaic_0001>
module attributes {stable_mosaic.version = 11 : i64} {
  func.func @_transition_kernel(%arg0: i32, %arg1: i32, %arg2: memref<1x8x2x8x256xbf16, #tpu.memory_space<vmem>>, %arg3: memref<1x256xf32, #tpu.memory_space<vmem>>, %arg4: memref<1x256xf32, #tpu.memory_space<vmem>>, %arg5: memref<128x128xbf16, #tpu.memory_space<vmem>>, %arg6: memref<1x8x8x128xbf16, #tpu.memory_space<vmem>>) attributes {dimension_semantics = [#tpu.dimension_semantics<parallel>, #tpu.dimension_semantics<parallel>], iteration_bounds = array<i64: 2, 1>, scalar_prefetch = 0 : i64, scratch_operands = 0 : i64, tpu.core_type = #tpu.core_type<tc>, window_params = [{transform_indices = @transform_0, window_bounds = array<i64: 1, 8, 2, 8, 256>}, {pipeline_mode = #tpu.pipeline_mode<synchronous>, transform_indices = @transform_1, window_bounds = array<i64: 1, 256>}, {pipeline_mode = #tpu.pipeline_mode<synchronous>, transform_indices = @transform_2, window_bounds = array<i64: 1, 256>}, {pipeline_mode = #tpu.pipeline_mode<synchronous>, transform_indices = @transform_3, window_bounds = array<i64: 128, 128>}, {transform_indices = @transform_4, window_bounds = array<i64: 1, 8, 8, 128>}]} {
    %c0 = arith.constant 0 : index
    %c0_0 = arith.constant 0 : index
    %0 = vector.load %arg3[%c0, %c0_0] : memref<1x256xf32, #tpu.memory_space<vmem>>, vector<1x256xf32>
    %c0_1 = arith.constant 0 : index
    %c0_2 = arith.constant 0 : index
    %1 = vector.load %arg4[%c0_1, %c0_2] : memref<1x256xf32, #tpu.memory_space<vmem>>, vector<1x256xf32>
    %c0_3 = arith.constant 0 : index
    %c0_4 = arith.constant 0 : index
    %c0_5 = arith.constant 0 : index
    %c0_6 = arith.constant 0 : index
    %c0_7 = arith.constant 0 : index
    %2 = vector.load %arg2[%c0_3, %c0_4, %c0_5, %c0_6, %c0_7] : memref<1x8x2x8x256xbf16, #tpu.memory_space<vmem>>, vector<1x8x2x8x256xbf16>
    %3 = vector.shape_cast %2 : vector<1x8x2x8x256xbf16> to vector<8x2x8x256xbf16>
    %4 = vector.extract_strided_slice %3 {offsets = [0, 0, 0, 0], sizes = [8, 1, 8, 256], strides = [1, 1, 1, 1]} : vector<8x2x8x256xbf16> to vector<8x1x8x256xbf16>
    %5 = vector.shape_cast %4 : vector<8x1x8x256xbf16> to vector<8x8x256xbf16>
    %6 = arith.extf %5 : vector<8x8x256xbf16> to vector<8x8x256xf32>
    %7 = vector.shape_cast %0 : vector<1x256xf32> to vector<1x1x256xf32>
    %8 = vector.broadcast %7 : vector<1x1x256xf32> to vector<8x8x256xf32>
    %9 = arith.mulf %6, %8 : vector<8x8x256xf32>
    %10 = vector.shape_cast %1 : vector<1x256xf32> to vector<1x1x256xf32>
    %11 = vector.broadcast %10 : vector<1x1x256xf32> to vector<8x8x256xf32>
    %12 = arith.addf %9, %11 : vector<8x8x256xf32>
    %cst = arith.constant 0.000000e+00 : f32
    %13 = vector.broadcast %cst : f32 to vector<8x8x256xf32>
    %14 = arith.maximumf %12, %13 : vector<8x8x256xf32>
    %15 = vector.extract_strided_slice %3 {offsets = [0, 1, 0, 0], sizes = [8, 1, 8, 256], strides = [1, 1, 1, 1]} : vector<8x2x8x256xbf16> to vector<8x1x8x256xbf16>
    %16 = vector.shape_cast %15 : vector<8x1x8x256xbf16> to vector<8x8x256xbf16>
    %17 = arith.extf %16 : vector<8x8x256xbf16> to vector<8x8x256xf32>
    %18 = vector.shape_cast %0 : vector<1x256xf32> to vector<1x1x256xf32>
    %19 = vector.broadcast %18 : vector<1x1x256xf32> to vector<8x8x256xf32>
    %20 = arith.mulf %17, %19 : vector<8x8x256xf32>
    %21 = vector.shape_cast %1 : vector<1x256xf32> to vector<1x1x256xf32>
    %22 = vector.broadcast %21 : vector<1x1x256xf32> to vector<8x8x256xf32>
    %23 = arith.addf %20, %22 : vector<8x8x256xf32>
    %cst_8 = arith.constant 0.000000e+00 : f32
    %24 = vector.broadcast %cst_8 : f32 to vector<8x8x256xf32>
    %25 = arith.maximumf %23, %24 : vector<8x8x256xf32>
    %26 = arith.addf %14, %25 : vector<8x8x256xf32>
    %27 = vector.extract_strided_slice %26 {offsets = [0, 0, 0], sizes = [8, 8, 128], strides = [1, 1, 1]} : vector<8x8x256xf32> to vector<8x8x128xf32>
    %28 = vector.extract_strided_slice %26 {offsets = [0, 0, 128], sizes = [8, 8, 128], strides = [1, 1, 1]} : vector<8x8x256xf32> to vector<8x8x128xf32>
    %29 = arith.addf %27, %28 : vector<8x8x128xf32>
    %30 = vector.shape_cast %29 : vector<8x8x128xf32> to vector<64x128xf32>
    %31 = arith.truncf %30 : vector<64x128xf32> to vector<64x128xbf16>
    %c0_9 = arith.constant 0 : index
    %c0_10 = arith.constant 0 : index
    %32 = vector.load %arg5[%c0_9, %c0_10] : memref<128x128xbf16, #tpu.memory_space<vmem>>, vector<128x128xbf16>
    %cst_11 = arith.constant dense<0.000000e+00> : vector<64x128xf32>
    %33 = tpu.matmul %31, %32, %cst_11 {dimension_numbers = #tpu.dot_dimension_numbers<[1], [0], [0], [1], [0, 0, 1, 1], [], []>} : vector<64x128xbf16>, vector<128x128xbf16>, vector<64x128xf32> -> vector<64x128xf32>
    %34 = vector.shape_cast %33 : vector<64x128xf32> to vector<8x8x128xf32>
    %35 = arith.truncf %34 : vector<8x8x128xf32> to vector<8x8x128xbf16>
    %c0_12 = arith.constant 0 : index
    %c0_13 = arith.constant 0 : index
    %c0_14 = arith.constant 0 : index
    %c0_15 = arith.constant 0 : index
    %36 = vector.load %arg6[%c0_12, %c0_13, %c0_14, %c0_15] : memref<1x8x8x128xbf16, #tpu.memory_space<vmem>>, vector<1x8x8x128xbf16>
    %37 = vector.shape_cast %36 : vector<1x8x8x128xbf16> to vector<8x8x128xbf16>
    %38 = vector.shape_cast %35 : vector<8x8x128xbf16> to vector<1x8x8x128xbf16>
    tpu.vector_store %arg6[%c0_12, %c0_13, %c0_14, %c0_15], %38 {strides = array<i32>} : memref<1x8x8x128xbf16, #tpu.memory_space<vmem>>, vector<1x8x8x128xbf16>,
    return
  }
  func.func @transform_0(%arg0: i32, %arg1: i32) -> (i32, i32, i32, i32, i32) {
    %c0_i32 = arith.constant 0 : i32
    %c0_i32_0 = arith.constant 0 : i32
    %c0_i32_1 = arith.constant 0 : i32
    %c0_i32_2 = arith.constant 0 : i32
    return %arg0, %arg1, %c0_i32, %c0_i32_0, %c0_i32_1 : i32, i32, i32, i32, i32
  }
  func.func @transform_1(%arg0: i32, %arg1: i32) -> (i32, i32) {
    %c0_i32 = arith.constant 0 : i32
    %c0_i32_0 = arith.constant 0 : i32
    %c0_i32_1 = arith.constant 0 : i32
    return %c0_i32, %c0_i32_0 : i32, i32
  }
  func.func @transform_2(%arg0: i32, %arg1: i32) -> (i32, i32) {
    %c0_i32 = arith.constant 0 : i32
    %c0_i32_0 = arith.constant 0 : i32
    %c0_i32_1 = arith.constant 0 : i32
    return %c0_i32, %c0_i32_0 : i32, i32
  }
  func.func @transform_3(%arg0: i32, %arg1: i32) -> (i32, i32) {
    %c0_i32 = arith.constant 0 : i32
    %c0_i32_0 = arith.constant 0 : i32
    %c0_i32_1 = arith.constant 0 : i32
    return %c0_i32, %c0_i32_0 : i32, i32
  }
  func.func @transform_4(%arg0: i32, %arg1: i32) -> (i32, i32, i32, i32) {
    %c0_i32 = arith.constant 0 : i32
    %c0_i32_0 = arith.constant 0 : i32
    %c0_i32_1 = arith.constant 0 : i32
    return %arg0, %arg1, %c0_i32, %c0_i32_0 : i32, i32, i32, i32
  }
}

module attributes {stable_mosaic.version = 11 : i64} {
  func.func @_transition_kernel(%arg0: i32, %arg1: i32, %arg2: memref<1x8x2x8x256xbf16, #tpu.memory_space<vmem>>, %arg3: memref<1x256xf32, #tpu.memory_space<vmem>>, %arg4: memref<1x256xf32, #tpu.memory_space<vmem>>, %arg5: memref<128x128xbf16, #tpu.memory_space<vmem>>, %arg6: memref<1x8x8x128xbf16, #tpu.memory_space<vmem>>) attributes {dimension_semantics = [#tpu.dimension_semantics<parallel>, #tpu.dimension_semantics<parallel>], iteration_bounds = array<i64: 2, 1>, scalar_prefetch = 0 : i64, scratch_operands = 0 : i64, tpu.core_type = #tpu.core_type<tc>, window_params = [{transform_indices = @transform_0, window_bounds = array<i64: 1, 8, 2, 8, 256>}, {pipeline_mode = #tpu.pipeline_mode<synchronous>, transform_indices = @transform_1, window_bounds = array<i64: 1, 256>}, {pipeline_mode = #tpu.pipeline_mode<synchronous>, transform_indices = @transform_2, window_bounds = array<i64: 1, 256>}, {pipeline_mode = #tpu.pipeline_mode<synchronous>, transform_indices = @transform_3, window_bounds = array<i64: 128, 128>}, {transform_indices = @transform_4, window_bounds = array<i64: 1, 8, 8, 128>}]} {
    %c0 = arith.constant 0 : index
    %c0_0 = arith.constant 0 : index
    %0 = vector.load %arg3[%c0, %c0_0] : memref<1x256xf32, #tpu.memory_space<vmem>>, vector<1x256xf32>
    %c0_1 = arith.constant 0 : index
    %c0_2 = arith.constant 0 : index
    %1 = vector.load %arg4[%c0_1, %c0_2] : memref<1x256xf32, #tpu.memory_space<vmem>>, vector<1x256xf32>
    %c0_3 = arith.constant 0 : index
    %c0_4 = arith.constant 0 : index
    %c0_5 = arith.constant 0 : index
    %c0_6 = arith.constant 0 : index
    %c0_7 = arith.constant 0 : index
    %2 = vector.load %arg2[%c0_3, %c0_4, %c0_5, %c0_6, %c0_7] : memref<1x8x2x8x256xbf16, #tpu.memory_space<vmem>>, vector<1x8x2x8x256xbf16>
    %3 = vector.shape_cast %2 : vector<1x8x2x8x256xbf16> to vector<8x2x8x256xbf16>
    %4 = vector.extract_strided_slice %3 {offsets = [0, 0, 0, 0], sizes = [8, 1, 8, 256], strides = [1, 1, 1, 1]} : vector<8x2x8x256xbf16> to vector<8x1x8x256xbf16>
    %5 = vector.shape_cast %4 : vector<8x1x8x256xbf16> to vector<8x8x256xbf16>
    %6 = arith.extf %5 : vector<8x8x256xbf16> to vector<8x8x256xf32>
    %7 = vector.shape_cast %0 : vector<1x256xf32> to vector<1x1x256xf32>
    %8 = vector.broadcast %7 : vector<1x1x256xf32> to vector<8x8x256xf32>
    %9 = arith.mulf %6, %8 : vector<8x8x256xf32>
    %10 = vector.shape_cast %1 : vector<1x256xf32> to vector<1x1x256xf32>
    %11 = vector.broadcast %10 : vector<1x1x256xf32> to vector<8x8x256xf32>
    %12 = arith.addf %9, %11 : vector<8x8x256xf32>
    %cst = arith.constant 0.000000e+00 : f32
    %13 = vector.broadcast %cst : f32 to vector<8x8x256xf32>
    %14 = arith.maximumf %12, %13 : vector<8x8x256xf32>
    %15 = vector.extract_strided_slice %3 {offsets = [0, 1, 0, 0], sizes = [8, 1, 8, 256], strides = [1, 1, 1, 1]} : vector<8x2x8x256xbf16> to vector<8x1x8x256xbf16>
    %16 = vector.shape_cast %15 : vector<8x1x8x256xbf16> to vector<8x8x256xbf16>
    %17 = arith.extf %16 : vector<8x8x256xbf16> to vector<8x8x256xf32>
    %18 = vector.shape_cast %0 : vector<1x256xf32> to vector<1x1x256xf32>
    %19 = vector.broadcast %18 : vector<1x1x256xf32> to vector<8x8x256xf32>
    %20 = arith.mulf %17, %19 : vector<8x8x256xf32>
    %21 = vector.shape_cast %1 : vector<1x256xf32> to vector<1x1x256xf32>
    %22 = vector.broadcast %21 : vector<1x1x256xf32> to vector<8x8x256xf32>
    %23 = arith.addf %20, %22 : vector<8x8x256xf32>
    %cst_8 = arith.constant 0.000000e+00 : f32
    %24 = vector.broadcast %cst_8 : f32 to vector<8x8x256xf32>
    %25 = arith.maximumf %23, %24 : vector<8x8x256xf32>
    %26 = arith.addf %14, %25 : vector<8x8x256xf32>
    %27 = vector.extract_strided_slice %26 {offsets = [0, 0, 0], sizes = [8, 8, 128], strides = [1, 1, 1]} : vector<8x8x256xf32> to vector<8x8x128xf32>
    %28 = vector.extract_strided_slice %26 {offsets = [0, 0, 128], sizes = [8, 8, 128], strides = [1, 1, 1]} : vector<8x8x256xf32> to vector<8x8x128xf32>
    %29 = arith.addf %27, %28 : vector<8x8x128xf32>
    %30 = vector.shape_cast %29 : vector<8x8x128xf32> to vector<64x128xf32>
    %31 = arith.truncf %30 : vector<64x128xf32> to vector<64x128xbf16>
    %c0_9 = arith.constant 0 : index
    %c0_10 = arith.constant 0 : index
    %32 = vector.load %arg5[%c0_9, %c0_10] : memref<128x128xbf16, #tpu.memory_space<vmem>>, vector<128x128xbf16>
    %cst_11 = arith.constant dense<0.000000e+00> : vector<64x128xf32>
    %33 = tpu.matmul %31, %32, %cst_11 {dimension_numbers = #tpu.dot_dimension_numbers<[1], [0], [0], [1], [0, 0, 1, 1], [], []>} : vector<64x128xbf16>, vector<128x128xbf16>, vector<64x128xf32> -> vector<64x128xf32>
    %34 = vector.shape_cast %33 : vector<64x128xf32> to vector<8x8x128xf32>
    %35 = arith.truncf %34 : vector<8x8x128xf32> to vector<8x8x128xbf16>
    %c0_12 = arith.constant 0 : index
    %c0_13 = arith.constant 0 : index
    %c0_14 = arith.constant 0 : index
    %c0_15 = arith.constant 0 : index
    %36 = vector.load %arg6[%c0_12, %c0_13, %c0_14, %c0_15] : memref<1x8x8x128xbf16, #tpu.memory_space<vmem>>, vector<1x8x8x128xbf16>
    %37 = vector.shape_cast %36 : vector<1x8x8x128xbf16> to vector<8x8x128xbf16>
    %38 = vector.shape_cast %35 : vector<8x8x128xbf16> to vector<1x8x8x128xbf16>
    tpu.vector_store %arg6[%c0_12, %c0_13, %c0_14, %c0_15], %38 {strides = array<i32>} : memref<1x8x8x128xbf16, #tpu.memory_space<vmem>>, vector<1x8x8x128xbf16>,
    return
  }
  func.func @transform_0(%arg0: i32, %arg1: i32) -> (i32, i32, i32, i32, i32) {
    %c0_i32 = arith.constant 0 : i32
    %c0_i32_0 = arith.constant 0 : i32
    %c0_i32_1 = arith.constant 0 : i32
    %c0_i32_2 = arith.constant 0 : i32
    return %arg0, %arg1, %c0_i32, %c0_i32_0, %c0_i32_1 : i32, i32, i32, i32, i32
  }
  func.func @transform_1(%arg0: i32, %arg1: i32) -> (i32, i32) {
    %c0_i32 = arith.constant 0 : i32
    %c0_i32_0 = arith.constant 0 : i32
    %c0_i32_1 = arith.constant 0 : i32
    return %c0_i32, %c0_i32_0 : i32, i32
  }
  func.func @transform_2(%arg0: i32, %arg1: i32) -> (i32, i32) {
    %c0_i32 = arith.constant 0 : i32
    %c0_i32_0 = arith.constant 0 : i32
    %c0_i32_1 = arith.constant 0 : i32
    return %c0_i32, %c0_i32_0 : i32, i32
  }
  func.func @transform_3(%arg0: i32, %arg1: i32) -> (i32, i32) {
    %c0_i32 = arith.constant 0 : i32
    %c0_i32_0 = arith.constant 0 : i32
    %c0_i32_1 = arith.constant 0 : i32
    return %c0_i32, %c0_i32_0 : i32, i32
  }
  func.func @transform_4(%arg0: i32, %arg1: i32) -> (i32, i32, i32, i32) {
    %c0_i32 = arith.constant 0 : i32
    %c0_i32_0 = arith.constant 0 : i32
    %c0_i32_1 = arith.constant 0 : i32
    return %arg0, %arg1, %c0_i32, %c0_i32_0 : i32, i32, i32, i32
  }
}

</mosaic_0001>

<llo_original>
// kernel: tpu_custom_call.1
$region0: #{tpu_custom_call.1}
  #allocation0 [shape = 'u32[]', space=smem, size = 0x4, offset = 0x4, fixed_abs, tag = 'smem constant byte address 0x4 - core index']
  #allocation1 [shape = 'u32[72,128]{1,0:T(1,128)}', space=vmem, size = 0x9000, scoped, tag = 'internal scratch']
  %s0 = inlined_call_operand.hbm [shape: bf16[2,8,2,8,256], index: 0, kind: input, shape index: {}]
  %s1 = inlined_call_operand.hbm [shape: f32[1,256], index: 1, kind: input, shape index: {}]
  %s2 = inlined_call_operand.hbm [shape: f32[1,256], index: 2, kind: input, shape index: {}]
  %s3 = inlined_call_operand.hbm [shape: bf16[128,128], index: 3, kind: input, shape index: {}]
  %s4 = inlined_call_operand.hbm [shape: bf16[2,8,8,128], index: 4, kind: output, shape index: {}]
  %s5 = sld [smem:[#allocation0]]
  $region65: #{tpu_custom_call.1} parent=0
    _
  %s7 = ssub.s32 1, %s5
  %s8 = scalar_select 0, %s7, %s5
  $region1: #{tpu_custom_call.1} parent=0
    #allocation2 [shape = 'u8[131072]{0}', space=vmem, size = 0x20000, scoped, tag = 'input window, operand 0']
    #allocation3 [shape = 's32[2]{0}', space=sflag, size = 0x8, scoped, tag = 'scoped memory for tpu_custom_call.1']
    #allocation4 [shape = 's32[2]{0}', space=sflag, size = 0x8, scoped, tag = 'scoped memory for tpu_custom_call.1']
    #allocation5 [shape = 'u8[1024]{0}', space=vmem, size = 0x400, scoped, tag = 'input window, operand 1, single buffered']
    #allocation6 [shape = 's32[1]{0}', space=sflag, size = 0x4, scoped, tag = 'scoped memory for tpu_custom_call.1']
    #allocation7 [shape = 'u8[1024]{0}', space=vmem, size = 0x400, scoped, tag = 'input window, operand 2, single buffered']
    #allocation8 [shape = 'u8[32768]{0}', space=vmem, size = 0x8000, scoped, tag = 'input window, operand 3, single buffered']
    #allocation9 [shape = 's32[1]{0}', space=sflag, size = 0x4, scoped, tag = 'scoped memory for tpu_custom_call.1']
    #allocation10 [shape = 'u8[32768]{0}', space=vmem, size = 0x8000, scoped, tag = 'output window, operand 0']
    %9 = vsyncpa [#allocation3], 0
    %s10 = scalar_lea.sflag [#allocation3], 1
    %11 = vsyncpa %s10, 0
    %12 = vsyncpa [#allocation6], 0
    %13 = vsyncpa [#allocation9], 0
    %14 = vsyncpa [#allocation4], 0
    %s15 = scalar_lea.sflag [#allocation4], 1
    %16 = vsyncpa %s15, 0
    loop: start=0, step=1, limit=4
    $region2: #{tpu_custom_call.1} parent=1 // loop_pre_header
      _
    $region3: #{tpu_custom_call.1} parent=1 // loop_header
      %s18 = sphi 0, %s22
      %p19 = scmp.ge.s32.totalorder %s18, 4
      %s25 = sphi 0, %s37
      %s26 = sphi 0, %s33
      %s27 = sphi 0, %s25
      %s28 = sphi 0, %s26
      %s29 = sphi 0, %s27
      %s30 = sphi 0, %s28
      %s42 = sphi 0, %s44
      %s45 = sphi 0, %s42
      %s46 = sphi 0, %s45
      %s62 = sphi 0, %s46
      %s66 = sphi 0, %s66
      %s68 = sphi 0, %s66
      %s69 = sphi 0, %s68
      %s83 = sphi 0, %s69
      %s87 = sphi 0, %s87
      %s89 = sphi 0, %s87
      %s90 = sphi 0, %s89
      %s104 = sphi 0, %s90
      %s108 = sphi 0, %s108
      %s110 = sphi 0, %s108
      %s111 = sphi 0, %s110
      %s125 = sphi 0, %s111
      %s133 = sphi 0, %s135
      %s136 = sphi 0, %s133
      %s137 = sphi 0, %s136
      %s153 = sphi 0, %s137
    $region4: #{tpu_custom_call.1} parent=1 // loop_header_branch
      %21 = sbr.rel (%p19) target = $region8
    $region5: #{tpu_custom_call.1} parent=1 // loop_body
      %s23 = ssub.s32 %s18, 1
      %s24 = ssub.s32 %s18, 2
      %s31 = sadd.s32 1, %s26
      %p32 = scmp.ge.s32.totalorder %s31, 1
      %s33 = scalar_select %p32, 0, %s31
      %s34 = sadd.s32 1, %s25
      %s35 = scalar_select %p32, %s34, %s25
      %p36 = scmp.ge.s32.totalorder %s35, 2
      %s37 = scalar_select %p36, 0, %s35
      %s38 = ssub.s32 %s25, %s37
      %s39 = ssub.s32 %s26, %s33
      %s40 = sor.u32 %s38, %s39
      %p41 = scmp.eq.s32.totalorder %s40, 0
      %s43 = sadd.s32 %s42, 1
      %s44 = scalar_select %p41, %s42, %s43
      %p47 = pneg %p41
      %p48 = scmp.eq.s32.totalorder %s18, 1
      %p49 = por %p47, %p48
      %p50 = scmp.ne.s32.totalorder %s42, %s45
      %p51 = scmp.eq.s32.totalorder %s18, 0
      %p52 = por %p50, %p51
      %p53 = scmp.ne.s32.totalorder %s42, %s45
      %p54 = scmp.eq.s32.totalorder %s23, 1
      %p55 = por %p53, %p54
      %p56 = scmp.ne.s32.totalorder %s45, %s46
      %p57 = scmp.eq.s32.totalorder %s23, 0
      %p58 = por %p56, %p57
      %p59 = scmp.ne.s32.totalorder %s45, %s46
      %p60 = scmp.eq.s32.totalorder %s24, 1
      %p61 = por %p59, %p60
      %p63 = scmp.ne.s32.totalorder %s46, %s62
      %p64 = scmp.eq.s32.totalorder %s24, 0
      %p65 = por %p63, %p64
      %s67 = sadd.s32 %s66, 1
      %p70 = scmp.eq.s32.totalorder %s18, 1
      %p71 = scmp.ne.s32.totalorder %s66, %s68
      %p72 = scmp.eq.s32.totalorder %s18, 0
      %p73 = por %p71, %p72
      %p74 = scmp.ne.s32.totalorder %s66, %s68
      %p75 = scmp.eq.s32.totalorder %s23, 1
      %p76 = por %p74, %p75
      %p77 = scmp.ne.s32.totalorder %s68, %s69
      %p78 = scmp.eq.s32.totalorder %s23, 0
      %p79 = por %p77, %p78
      %p80 = scmp.ne.s32.totalorder %s68, %s69
      %p81 = scmp.eq.s32.totalorder %s24, 1
      %p82 = por %p80, %p81
      %p84 = scmp.ne.s32.totalorder %s69, %s83
      %p85 = scmp.eq.s32.totalorder %s24, 0
      %p86 = por %p84, %p85
      %s88 = sadd.s32 %s87, 1
      %p91 = scmp.eq.s32.totalorder %s18, 1
      %p92 = scmp.ne.s32.totalorder %s87, %s89
      %p93 = scmp.eq.s32.totalorder %s18, 0
      %p94 = por %p92, %p93
      %p95 = scmp.ne.s32.totalorder %s87, %s89
      %p96 = scmp.eq.s32.totalorder %s23, 1
      %p97 = por %p95, %p96
      %p98 = scmp.ne.s32.totalorder %s89, %s90
      %p99 = scmp.eq.s32.totalorder %s23, 0
      %p100 = por %p98, %p99
      %p101 = scmp.ne.s32.totalorder %s89, %s90
      %p102 = scmp.eq.s32.totalorder %s24, 1
      %p103 = por %p101, %p102
      %p105 = scmp.ne.s32.totalorder %s90, %s104
      %p106 = scmp.eq.s32.totalorder %s24, 0
      %p107 = por %p105, %p106
      %s109 = sadd.s32 %s108, 1
      %p112 = scmp.eq.s32.totalorder %s18, 1
      %p113 = scmp.ne.s32.totalorder %s108, %s110
      %p114 = scmp.eq.s32.totalorder %s18, 0
      %p115 = por %p113, %p114
      %p116 = scmp.ne.s32.totalorder %s108, %s110
      %p117 = scmp.eq.s32.totalorder %s23, 1
      %p118 = por %p116, %p117
      %p119 = scmp.ne.s32.totalorder %s110, %s111
      %p120 = scmp.eq.s32.totalorder %s23, 0
      %p121 = por %p119, %p120
      %p122 = scmp.ne.s32.totalorder %s110, %s111
      %p123 = scmp.eq.s32.totalorder %s24, 1
      %p124 = por %p122, %p123
      %p126 = scmp.ne.s32.totalorder %s111, %s125
      %p127 = scmp.eq.s32.totalorder %s24, 0
      %p128 = por %p126, %p127
      %s129 = ssub.s32 %s25, %s37
      %s130 = ssub.s32 %s26, %s33
      %s131 = sor.u32 %s129, %s130
      %p132 = scmp.eq.s32.totalorder %s131, 0
      %s134 = sadd.s32 %s133, 1
      %s135 = scalar_select %p132, %s133, %s134
      %p138 = pneg %p132
      %p139 = scmp.eq.s32.totalorder %s18, 1
      %p140 = por %p138, %p139
      %p141 = scmp.ne.s32.totalorder %s133, %s136
      %p142 = scmp.eq.s32.totalorder %s18, 0
      %p143 = por %p141, %p142
      %p144 = scmp.ne.s32.totalorder %s133, %s136
      %p145 = scmp.eq.s32.totalorder %s23, 1
      %p146 = por %p144, %p145
      %p147 = scmp.ne.s32.totalorder %s136, %s137
      %p148 = scmp.eq.s32.totalorder %s23, 0
      %p149 = por %p147, %p148
      %p150 = scmp.ne.s32.totalorder %s136, %s137
      %p151 = scmp.eq.s32.totalorder %s24, 1
      %p152 = por %p150, %p151
      %p154 = scmp.ne.s32.totalorder %s137, %s153
      %p155 = scmp.eq.s32.totalorder %s24, 0
      %p156 = por %p154, %p155
      %p157 = scmp.le.s32.totalorder 1, %s18
      %p158 = scmp.lt.s32.totalorder %s18, 3
      %p159 = pnand %p157, %p158
      %p160 = pneg %p159
      // Predicated region
      $region9: #{tpu_custom_call.1} parent=5 // pred_check
        _
      $region10: #{tpu_custom_call.1} parent=5 // pred_check_branch
        %162 = sbr.rel (%p159) target = $region12
      $region11: #{tpu_custom_call.1} parent=5 // pred_region
        %s163 = ssub.s32 %s18, 1
        // Predicated region
        $region13: #{tpu_custom_call.1} parent=11 // pred_check
          %p164 = pneg %p79
        $region14: #{tpu_custom_call.1} parent=11 // pred_check_branch
          %166 = sbr.rel (%p164) target = $region16
        $region15: #{tpu_custom_call.1} parent=11 // pred_region
          %168 = vsyncadd [#allocation6], 0
          %s170 = sshll.u32 %s1, 4
          %s171 = int_to_ptr.hbm [resolvable:$true] %s170
          %s172 = sshll.u32 [#allocation5], 4
          %s173 = int_to_ptr.vmem [resolvable:$true] %s172
          %175 = dma.hbm_to_vmem [thread:$0]  %s171, 32, %s173, [#allocation6]
        $region16: #{tpu_custom_call.1} parent=11 // pred_fallthru
          _
        // Predicated region
        $region17: #{tpu_custom_call.1} parent=11 // pred_check
          %p176 = pneg %p100
        $region18: #{tpu_custom_call.1} parent=11 // pred_check_branch
          %178 = sbr.rel (%p176) target = $region20
        $region19: #{tpu_custom_call.1} parent=11 // pred_region
          %180 = vsyncadd [#allocation6], 0
          %s182 = sshll.u32 %s2, 4
          %s183 = int_to_ptr.hbm [resolvable:$true] %s182
          %s184 = sshll.u32 [#allocation7], 4
          %s185 = int_to_ptr.vmem [resolvable:$true] %s184
          %187 = dma.hbm_to_vmem [thread:$0]  %s183, 32, %s185, [#allocation6]
        $region20: #{tpu_custom_call.1} parent=11 // pred_fallthru
          _
        // Predicated region
        $region21: #{tpu_custom_call.1} parent=11 // pred_check
          %p188 = pneg %p121
        $region22: #{tpu_custom_call.1} parent=11 // pred_check_branch
          %190 = sbr.rel (%p188) target = $region24
        $region23: #{tpu_custom_call.1} parent=11 // pred_region
          %192 = vsyncadd [#allocation9], 0
          %s193 = sshll.u32 %s3, 4
          %s194 = int_to_ptr.hbm [resolvable:$true] %s193
          %s195 = sshll.u32 [#allocation8], 4
          %s196 = int_to_ptr.vmem [resolvable:$true] %s195
          %201 = dma.hbm_to_vmem [thread:$0]  %s194, 1024, %s196, [#allocation9], 64, 64, 4
        $region24: #{tpu_custom_call.1} parent=11 // pred_fallthru
          _
      $region12: #{tpu_custom_call.1} parent=5 // pred_fallthru
        _
      %p202 = scmp.lt.s32.totalorder %s18, 2
      // Predicated region
      $region25: #{tpu_custom_call.1} parent=5 // pred_check
        %p203 = pneg %p202
      $region26: #{tpu_custom_call.1} parent=5 // pred_check_branch
        %205 = sbr.rel (%p203) target = $region28
      $region27: #{tpu_custom_call.1} parent=5 // pred_region
        // Predicated region
        $region29: #{tpu_custom_call.1} parent=27 // pred_check
          %p206 = pneg %p52
        $region30: #{tpu_custom_call.1} parent=27 // pred_check_branch
          %208 = sbr.rel (%p206) target = $region32
        $region31: #{tpu_custom_call.1} parent=27 // pred_region
          %s209 = sand.u32 %s42, 1
          %s210 = scalar_lea.sflag [#allocation3], %s209
          %s211 = sand.u32 %s42, 1
          %s212 = smul.addr %s211, 128
          %s213 = scalar_lea.vmem [#allocation2], %s212
          %s214 = smul.u32 8, %s26
          %216 = vsyncadd %s210, 0
          %s217 = smul.addr %s214, 4
          %s218 = smul.addr %s25, 32
          %s219 = sadd.s32 %s217, %s218
          %s220 = smul.addr %s219, 4
          %s221 = scalar_lea.hbm %s0, %s220
          %s222 = sshll.u32 %s221, 4
          %s223 = int_to_ptr.hbm [resolvable:$true] %s222
          %s224 = sshll.u32 %s213, 4
          %s225 = int_to_ptr.vmem [resolvable:$true] %s224
          %230 = dma.hbm_to_vmem [thread:$0]  %s223, 2048, %s225, %s210, 128, 128, 8
        $region32: #{tpu_custom_call.1} parent=27 // pred_fallthru
          _
      $region28: #{tpu_custom_call.1} parent=5 // pred_fallthru
        _
      %p231 = scmp.le.s32.totalorder 1, %s18
      %p232 = scmp.lt.s32.totalorder %s18, 3
      %p233 = pnand %p231, %p232
      %p234 = pneg %p233
      // Predicated region
      $region33: #{tpu_custom_call.1} parent=5 // pred_check
        _
      $region34: #{tpu_custom_call.1} parent=5 // pred_check_branch
        %236 = sbr.rel (%p233) target = $region36
      $region35: #{tpu_custom_call.1} parent=5 // pred_region
        %s237 = ssub.s32 %s18, 1
        %s238 = sand.u32 %s45, 1
        %s239 = scalar_lea.sflag [#allocation3], %s238
        %s240 = sand.u32 %s45, 1
        %s241 = smul.addr %s240, 128
        %s242 = scalar_lea.vmem [#allocation2], %s241
        // Predicated region
        $region37: #{tpu_custom_call.1} parent=35 // pred_check
          %p243 = pneg %p58
        $region38: #{tpu_custom_call.1} parent=35 // pred_check_branch
          %245 = sbr.rel (%p243) target = $region40
        $region39: #{tpu_custom_call.1} parent=35 // pred_region
          %247 = dma.done %s239, 2048
        $region40: #{tpu_custom_call.1} parent=35 // pred_fallthru
          _
        // Predicated region
        $region41: #{tpu_custom_call.1} parent=35 // pred_check
          %p248 = pneg %p79
        $region42: #{tpu_custom_call.1} parent=35 // pred_check_branch
          %250 = sbr.rel (%p248) target = $region44
        $region43: #{tpu_custom_call.1} parent=35 // pred_region
          %252 = dma.done [#allocation6], 32
        $region44: #{tpu_custom_call.1} parent=35 // pred_fallthru
          _
        // Predicated region
        $region45: #{tpu_custom_call.1} parent=35 // pred_check
          %p253 = pneg %p100
        $region46: #{tpu_custom_call.1} parent=35 // pred_check_branch
          %255 = sbr.rel (%p253) target = $region48
        $region47: #{tpu_custom_call.1} parent=35 // pred_region
          %257 = dma.done [#allocation6], 32
        $region48: #{tpu_custom_call.1} parent=35 // pred_fallthru
          _
        // Predicated region
        $region49: #{tpu_custom_call.1} parent=35 // pred_check
          %p258 = pneg %p121
        $region50: #{tpu_custom_call.1} parent=35 // pred_check_branch
          %260 = sbr.rel (%p258) target = $region52
        $region51: #{tpu_custom_call.1} parent=35 // pred_region
          %262 = dma.done [#allocation9], 1024
        $region52: #{tpu_custom_call.1} parent=35 // pred_fallthru
          _
        %s263 = sand.u32 %s45, 1
        %s264 = scalar_lea.sflag [#allocation3], %s263
        %s265 = sand.u32 %s45, 1
        %s266 = smul.addr %s265, 128
        %s267 = scalar_lea.vmem [#allocation2], %s266
        %p268 = pneg %p58
        %p269 = pneg %p55
        %p270 = pneg %p79
        %p271 = pneg %p76
        %p272 = pneg %p100
        %p273 = pneg %p97
        %p274 = pneg %p121
        %p275 = pneg %p118
        %p276 = pneg %p149
        %p277 = pneg %p146
        %s278 = sand.u32 %s136, 1
        %s279 = scalar_lea.sflag [#allocation4], %s278
        %s280 = sand.u32 %s136, 1
        %s281 = smul.addr %s280, 32
        %s282 = scalar_lea.vmem [#allocation10], %s281
        %s283 = smul.u32 8, %s28
        %s284 = smul.u32 8, %s28
        %v285 = vld [vmem:[#allocation5] sm:$0x3]
        %v286 = vld [vmem:[#allocation7] sm:$0x3]
        %v287 = vld [vmem:[%s242] sm:$0xff]
        %v288 = vld [vmem:[%s242 + $0x8] sm:$0xff]
        %v289 = vld [vmem:[%s242 + $0x10] sm:$0xff]
        %v290 = vld [vmem:[%s242 + $0x18] sm:$0xff]
        %v291 = vld [vmem:[%s242 + $0x20] sm:$0xff]
        %v292 = vld [vmem:[%s242 + $0x28] sm:$0xff]
        %v293 = vld [vmem:[%s242 + $0x30] sm:$0xff]
        %v294 = vld [vmem:[%s242 + $0x38] sm:$0xff]
        %v295 = vld [vmem:[%s242 + $0x40] sm:$0xff]
        %v296 = vld [vmem:[%s242 + $0x48] sm:$0xff]
        %v297 = vld [vmem:[%s242 + $0x50] sm:$0xff]
        %v298 = vld [vmem:[%s242 + $0x58] sm:$0xff]
        %v299 = vld [vmem:[%s242 + $0x60] sm:$0xff]
        %v300 = vld [vmem:[%s242 + $0x68] sm:$0xff]
        %v301 = vld [vmem:[%s242 + $0x70] sm:$0xff]
        %v302 = vld [vmem:[%s242 + $0x78] sm:$0xff]
        %v303 = vunpack.c.l.bf16 %v287
        %v304 = vunpack.c.h.bf16 %v287
        %v305 = vunpack.c.l.bf16 %v289
        %v306 = vunpack.c.h.bf16 %v289
        %v307 = vunpack.c.l.bf16 %v291
        %v308 = vunpack.c.h.bf16 %v291
        %v309 = vunpack.c.l.bf16 %v293
        %v310 = vunpack.c.h.bf16 %v293
        %v311 = vunpack.c.l.bf16 %v295
        %v312 = vunpack.c.h.bf16 %v295
        %v313 = vunpack.c.l.bf16 %v297
        %v314 = vunpack.c.h.bf16 %v297
        %v315 = vunpack.c.l.bf16 %v299
        %v316 = vunpack.c.h.bf16 %v299
        %v317 = vunpack.c.l.bf16 %v301
        %v318 = vunpack.c.h.bf16 %v301
        %v320 = vperm.slane %v285, 0
        %v321 = vperm.slane %v285, 1
        %v324 = vmul.f32 %v303, %v320
        %v325 = vmul.f32 %v304, %v321
        %v326 = vmul.f32 %v305, %v320
        %v327 = vmul.f32 %v306, %v321
        %v328 = vmul.f32 %v307, %v320
        %v329 = vmul.f32 %v308, %v321
        %v330 = vmul.f32 %v309, %v320
        %v331 = vmul.f32 %v310, %v321
        %v332 = vmul.f32 %v311, %v320
        %v333 = vmul.f32 %v312, %v321
        %v334 = vmul.f32 %v313, %v320
        %v335 = vmul.f32 %v314, %v321
        %v336 = vmul.f32 %v315, %v320
        %v337 = vmul.f32 %v316, %v321
        %v338 = vmul.f32 %v317, %v320
        %v339 = vmul.f32 %v318, %v321
        %v341 = vperm.slane %v286, 0
        %v342 = vperm.slane %v286, 1
        %v345 = vadd.f32 %v324, %v341
        %v346 = vadd.f32 %v325, %v342
        %v347 = vadd.f32 %v326, %v341
        %v348 = vadd.f32 %v327, %v342
        %v349 = vadd.f32 %v328, %v341
        %v350 = vadd.f32 %v329, %v342
        %v351 = vadd.f32 %v330, %v341
        %v352 = vadd.f32 %v331, %v342
        %v353 = vadd.f32 %v332, %v341
        %v354 = vadd.f32 %v333, %v342
        %v355 = vadd.f32 %v334, %v341
        %v356 = vadd.f32 %v335, %v342
        %v357 = vadd.f32 %v336, %v341
        %v358 = vadd.f32 %v337, %v342
        %v359 = vadd.f32 %v338, %v341
        %v360 = vadd.f32 %v339, %v342
        %v361 = vmax.f32 %v345, 0.0
        %v362 = vmax.f32 %v346, 0.0
        %v363 = vmax.f32 %v347, 0.0
        %v364 = vmax.f32 %v348, 0.0
        %v365 = vmax.f32 %v349, 0.0
        %v366 = vmax.f32 %v350, 0.0
        %v367 = vmax.f32 %v351, 0.0
        %v368 = vmax.f32 %v352, 0.0
        %v369 = vmax.f32 %v353, 0.0
        %v370 = vmax.f32 %v354, 0.0
        %v371 = vmax.f32 %v355, 0.0
        %v372 = vmax.f32 %v356, 0.0
        %v373 = vmax.f32 %v357, 0.0
        %v374 = vmax.f32 %v358, 0.0
        %v375 = vmax.f32 %v359, 0.0
        %v376 = vmax.f32 %v360, 0.0
        %v377 = vunpack.c.l.bf16 %v288
        %v378 = vunpack.c.h.bf16 %v288
        %v379 = vunpack.c.l.bf16 %v290
        %v380 = vunpack.c.h.bf16 %v290
        %v381 = vunpack.c.l.bf16 %v292
        %v382 = vunpack.c.h.bf16 %v292
        %v383 = vunpack.c.l.bf16 %v294
        %v384 = vunpack.c.h.bf16 %v294
        %v385 = vunpack.c.l.bf16 %v296
        %v386 = vunpack.c.h.bf16 %v296
        %v387 = vunpack.c.l.bf16 %v298
        %v388 = vunpack.c.h.bf16 %v298
        %v389 = vunpack.c.l.bf16 %v300
        %v390 = vunpack.c.h.bf16 %v300
        %v391 = vunpack.c.l.bf16 %v302
        %v392 = vunpack.c.h.bf16 %v302
        %v393 = vmul.f32 %v377, %v320
        %v394 = vmul.f32 %v378, %v321
        %v395 = vmul.f32 %v379, %v320
        %v396 = vmul.f32 %v380, %v321
        %v397 = vmul.f32 %v381, %v320
        %v398 = vmul.f32 %v382, %v321
        %v399 = vmul.f32 %v383, %v320
        %v400 = vmul.f32 %v384, %v321
        %v401 = vmul.f32 %v385, %v320
        %v402 = vmul.f32 %v386, %v321
        %v403 = vmul.f32 %v387, %v320
        %v404 = vmul.f32 %v388, %v321
        %v405 = vmul.f32 %v389, %v320
        %v406 = vmul.f32 %v390, %v321
        %v407 = vmul.f32 %v391, %v320
        %v408 = vmul.f32 %v392, %v321
        %v409 = vadd.f32 %v393, %v341
        %v410 = vadd.f32 %v394, %v342
        %v411 = vadd.f32 %v395, %v341
        %v412 = vadd.f32 %v396, %v342
        %v413 = vadd.f32 %v397, %v341
        %v414 = vadd.f32 %v398, %v342
        %v415 = vadd.f32 %v399, %v341
        %v416 = vadd.f32 %v400, %v342
        %v417 = vadd.f32 %v401, %v341
        %v418 = vadd.f32 %v402, %v342
        %v419 = vadd.f32 %v403, %v341
        %v420 = vadd.f32 %v404, %v342
        %v421 = vadd.f32 %v405, %v341
        %v422 = vadd.f32 %v406, %v342
        %v423 = vadd.f32 %v407, %v341
        %v424 = vadd.f32 %v408, %v342
        %v425 = vmax.f32 %v409, 0.0
        %v426 = vmax.f32 %v410, 0.0
        %v427 = vmax.f32 %v411, 0.0
        %v428 = vmax.f32 %v412, 0.0
        %v429 = vmax.f32 %v413, 0.0
        %v430 = vmax.f32 %v414, 0.0
        %v431 = vmax.f32 %v415, 0.0
        %v432 = vmax.f32 %v416, 0.0
        %v433 = vmax.f32 %v417, 0.0
        %v434 = vmax.f32 %v418, 0.0
        %v435 = vmax.f32 %v419, 0.0
        %v436 = vmax.f32 %v420, 0.0
        %v437 = vmax.f32 %v421, 0.0
        %v438 = vmax.f32 %v422, 0.0
        %v439 = vmax.f32 %v423, 0.0
        %v440 = vmax.f32 %v424, 0.0
        %v441 = vadd.f32 %v361, %v425
        %v442 = vadd.f32 %v362, %v426
        %v443 = vadd.f32 %v363, %v427
        %v444 = vadd.f32 %v364, %v428
        %v445 = vadd.f32 %v365, %v429
        %v446 = vadd.f32 %v366, %v430
        %v447 = vadd.f32 %v367, %v431
        %v448 = vadd.f32 %v368, %v432
        %v449 = vadd.f32 %v369, %v433
        %v450 = vadd.f32 %v370, %v434
        %v451 = vadd.f32 %v371, %v435
        %v452 = vadd.f32 %v372, %v436
        %v453 = vadd.f32 %v373, %v437
        %v454 = vadd.f32 %v374, %v438
        %v455 = vadd.f32 %v375, %v439
        %v456 = vadd.f32 %v376, %v440
        %v457 = vadd.f32 %v441, %v442
        %v458 = vadd.f32 %v443, %v444
        %v459 = vadd.f32 %v445, %v446
        %v460 = vadd.f32 %v447, %v448
        %v461 = vadd.f32 %v449, %v450
        %v462 = vadd.f32 %v451, %v452
        %v463 = vadd.f32 %v453, %v454
        %v464 = vadd.f32 %v455, %v456
        %v465 = vpack.c.bf16 %v458, %v457
        %v466 = vpack.c.bf16 %v460, %v459
        %v467 = vpack.c.bf16 %v462, %v461
        %v468 = vpack.c.bf16 %v464, %v463
        %v469 = vld [vmem:[#allocation8] sm:$0xf]
        %v470 = vld [vmem:[#allocation8 + $0x4] sm:$0xf]
        %v471 = vld [vmem:[#allocation8 + $0x8] sm:$0xf]
        %v472 = vld [vmem:[#allocation8 + $0xc] sm:$0xf]
        %v473 = vld [vmem:[#allocation8 + $0x10] sm:$0xf]
        %v474 = vld [vmem:[#allocation8 + $0x14] sm:$0xf]
        %v475 = vld [vmem:[#allocation8 + $0x18] sm:$0xf]
        %v476 = vld [vmem:[#allocation8 + $0x1c] sm:$0xf]
        %v477 = vld [vmem:[#allocation8 + $0x20] sm:$0xf]
        %v478 = vld [vmem:[#allocation8 + $0x24] sm:$0xf]
        %v479 = vld [vmem:[#allocation8 + $0x28] sm:$0xf]
        %v480 = vld [vmem:[#allocation8 + $0x2c] sm:$0xf]
        %v481 = vld [vmem:[#allocation8 + $0x30] sm:$0xf]
        %v482 = vld [vmem:[#allocation8 + $0x34] sm:$0xf]
        %v483 = vld [vmem:[#allocation8 + $0x38] sm:$0xf]
        %v484 = vld [vmem:[#allocation8 + $0x3c] sm:$0xf]
        %v501 = vunpack.c.l.b16 %v469
        %v502 = vunpack.c.l.b16 %v470
        %v503 = vunpack.c.l.b16 %v471
        %v504 = vunpack.c.l.b16 %v472
        %v505 = vunpack.c.l.b16 %v473
        %v506 = vunpack.c.l.b16 %v474
        %v507 = vunpack.c.l.b16 %v475
        %v508 = vunpack.c.l.b16 %v476
        %v509 = vunpack.c.l.b16 %v477
        %v510 = vunpack.c.l.b16 %v478
        %v511 = vunpack.c.l.b16 %v479
        %v512 = vunpack.c.l.b16 %v480
        %v513 = vunpack.c.l.b16 %v481
        %v514 = vunpack.c.l.b16 %v482
        %v515 = vunpack.c.l.b16 %v483
        %v516 = vunpack.c.l.b16 %v484
        %v517 = vpack.c.b16 %v502, %v501
        %v518 = vpack.c.b16 %v504, %v503
        %v519 = vpack.c.b16 %v506, %v505
        %v520 = vpack.c.b16 %v508, %v507
        %v521 = vpack.c.b16 %v510, %v509
        %v522 = vpack.c.b16 %v512, %v511
        %v523 = vpack.c.b16 %v514, %v513
        %v524 = vpack.c.b16 %v516, %v515
        %533 = vmatpush.bf16.msra.mxu0 %v524
        %534 = vmatpush.bf16.msra.mxu0 %v523
        %535 = vmatpush.bf16.msra.mxu0 %v522
        %536 = vmatpush.bf16.msra.mxu0 %v521
        %537 = vmatpush.bf16.msra.mxu0 %v520
        %538 = vmatpush.bf16.msra.mxu0 %v519
        %539 = vmatpush.bf16.msra.mxu0 %v518
        %540 = vmatpush.bf16.msra.mxu0 %v517
        %541 = vmatmul.bf16.gmra.mxu0 %v465
        %v542 = vpop.f32.mrf.mxu0
        %v543 = vadd.f32 0.0, %v542
        %v544 = vpop.f32.mrf.mxu0
        %v545 = vadd.f32 0.0, %v544
        %546 = vmatmul.bf16.gmra.mxu0 %v466
        %v547 = vpop.f32.mrf.mxu0
        %v548 = vadd.f32 0.0, %v547
        %v549 = vpop.f32.mrf.mxu0
        %v550 = vadd.f32 0.0, %v549
        %551 = vmatmul.bf16.gmra.mxu0 %v467
        %v552 = vpop.f32.mrf.mxu0
        %v553 = vadd.f32 0.0, %v552
        %v554 = vpop.f32.mrf.mxu0
        %v555 = vadd.f32 0.0, %v554
        %556 = vmatmul.bf16.gmra.mxu0 %v468
        %v557 = vpop.f32.mrf.mxu0
        %v558 = vadd.f32 0.0, %v557
        %v559 = vpop.f32.mrf.mxu0
        %v560 = vadd.f32 0.0, %v559
        %561 = vdwg.mxu0
        %v562 = vpack.c.bf16 %v543, %v543
        %v563 = vpack.c.bf16 %v545, %v545
        %v564 = vpack.c.bf16 %v548, %v548
        %v565 = vpack.c.bf16 %v550, %v550
        %v566 = vpack.c.bf16 %v553, %v553
        %v567 = vpack.c.bf16 %v555, %v555
        %v568 = vpack.c.bf16 %v558, %v558
        %v569 = vpack.c.bf16 %v560, %v560
        %570 = vst [vmem:[%s282] sm:$0xf] %v562
        %571 = vst [vmem:[%s282 + $0x4] sm:$0xf] %v563
        %572 = vst [vmem:[%s282 + $0x8] sm:$0xf] %v564
        %573 = vst [vmem:[%s282 + $0xc] sm:$0xf] %v565
        %574 = vst [vmem:[%s282 + $0x10] sm:$0xf] %v566
        %575 = vst [vmem:[%s282 + $0x14] sm:$0xf] %v567
        %576 = vst [vmem:[%s282 + $0x18] sm:$0xf] %v568
        %577 = vst [vmem:[%s282 + $0x1c] sm:$0xf] %v569
        %s578 = sand.u32 %s136, 1
        %s579 = scalar_lea.sflag [#allocation4], %s578
        %s580 = sand.u32 %s136, 1
        %s581 = smul.addr %s580, 32
        %s582 = scalar_lea.vmem [#allocation10], %s581
        // Predicated region
        $region53: #{tpu_custom_call.1} parent=35 // pred_check
          %p583 = pneg %p146
        $region54: #{tpu_custom_call.1} parent=35 // pred_check_branch
          %585 = sbr.rel (%p583) target = $region56
        $region55: #{tpu_custom_call.1} parent=35 // pred_region
          %s586 = smul.u32 8, %s28
          %588 = vsyncadd %s579, 0
          %s589 = smul.addr %s27, 8
          %s590 = sadd.s32 %s586, %s589
          %s591 = smul.addr %s590, 4
          %s592 = scalar_lea.hbm %s4, %s591
          %s593 = sshll.u32 %s582, 4
          %s594 = int_to_ptr.vmem [resolvable:$true] %s593
          %s595 = sshll.u32 %s592, 4
          %s596 = int_to_ptr.hbm [resolvable:$true] %s595
          %601 = dma.vmem_to_hbm [thread:$0]  %s594, 512, %s596, %s579, 64, 64, 4
        $region56: #{tpu_custom_call.1} parent=35 // pred_fallthru
          _
      $region36: #{tpu_custom_call.1} parent=5 // pred_fallthru
        _
      %p602 = scmp.le.s32.totalorder 2, %s18
      // Predicated region
      $region57: #{tpu_custom_call.1} parent=5 // pred_check
        %p603 = pneg %p602
      $region58: #{tpu_custom_call.1} parent=5 // pred_check_branch
        %605 = sbr.rel (%p603) target = $region60
      $region59: #{tpu_custom_call.1} parent=5 // pred_region
        %s606 = ssub.s32 %s18, 2
        // Predicated region
        $region61: #{tpu_custom_call.1} parent=59 // pred_check
          %p607 = pneg %p152
        $region62: #{tpu_custom_call.1} parent=59 // pred_check_branch
          %609 = sbr.rel (%p607) target = $region64
        $region63: #{tpu_custom_call.1} parent=59 // pred_region
          %s610 = sand.u32 %s137, 1
          %s611 = scalar_lea.sflag [#allocation4], %s610
          %s612 = sand.u32 %s137, 1
          %s613 = smul.addr %s612, 32
          %s614 = scalar_lea.vmem [#allocation10], %s613
          %616 = dma.done %s611, 512
        $region64: #{tpu_custom_call.1} parent=59 // pred_fallthru
          _
      $region60: #{tpu_custom_call.1} parent=5 // pred_fallthru
        _
    $region6: #{tpu_custom_call.1} parent=1 // loop_footer
      %s22 = sadd.s32 1, %s18
    $region7: #{tpu_custom_call.1} parent=1 // loop_footer_branch
      %17 = sbr.rel target = $region3
    $region8: #{tpu_custom_call.1} parent=1 // loop_exit
      _
    %617 = vsyncpa [#allocation3], 1
    %s618 = scalar_lea.sflag [#allocation3], 1
    %619 = vsyncpa %s618, 1
    %620 = vsyncpa [#allocation6], 1
    %621 = vsyncpa [#allocation9], 1
    %622 = vsyncpa [#allocation4], 1
    %s623 = scalar_lea.sflag [#allocation4], 1
    %624 = vsyncpa %s623, 1

// kernel: tpu_custom_call.1
$region0: #{tpu_custom_call.1}
  #allocation0 [shape = 'u32[]', space=smem, size = 0x4, offset = 0x4, fixed_abs, tag = 'smem constant byte address 0x4 - core index']
  #allocation1 [shape = 'u32[72,128]{1,0:T(1,128)}', space=vmem, size = 0x9000, scoped, tag = 'internal scratch']
  %s0 = inlined_call_operand.hbm [shape: bf16[2,8,2,8,256], index: 0, kind: input, shape index: {}]
  %s1 = inlined_call_operand.hbm [shape: f32[1,256], index: 1, kind: input, shape index: {}]
  %s2 = inlined_call_operand.hbm [shape: f32[1,256], index: 2, kind: input, shape index: {}]
  %s3 = inlined_call_operand.hbm [shape: bf16[128,128], index: 3, kind: input, shape index: {}]
  %s4 = inlined_call_operand.hbm [shape: bf16[2,8,8,128], index: 4, kind: output, shape index: {}]
  %s5 = sld [smem:[#allocation0]]
  $region65: #{tpu_custom_call.1} parent=0
    _
  %s7 = ssub.s32 1, %s5
  %s8 = scalar_select 0, %s7, %s5
  $region1: #{tpu_custom_call.1} parent=0
    #allocation2 [shape = 'u8[131072]{0}', space=vmem, size = 0x20000, scoped, tag = 'input window, operand 0']
    #allocation3 [shape = 's32[2]{0}', space=sflag, size = 0x8, scoped, tag = 'scoped memory for tpu_custom_call.1']
    #allocation4 [shape = 's32[2]{0}', space=sflag, size = 0x8, scoped, tag = 'scoped memory for tpu_custom_call.1']
    #allocation5 [shape = 'u8[1024]{0}', space=vmem, size = 0x400, scoped, tag = 'input window, operand 1, single buffered']
    #allocation6 [shape = 's32[1]{0}', space=sflag, size = 0x4, scoped, tag = 'scoped memory for tpu_custom_call.1']
    #allocation7 [shape = 'u8[1024]{0}', space=vmem, size = 0x400, scoped, tag = 'input window, operand 2, single buffered']
    #allocation8 [shape = 'u8[32768]{0}', space=vmem, size = 0x8000, scoped, tag = 'input window, operand 3, single buffered']
    #allocation9 [shape = 's32[1]{0}', space=sflag, size = 0x4, scoped, tag = 'scoped memory for tpu_custom_call.1']
    #allocation10 [shape = 'u8[32768]{0}', space=vmem, size = 0x8000, scoped, tag = 'output window, operand 0']
    %9 = vsyncpa [#allocation3], 0
    %s10 = scalar_lea.sflag [#allocation3], 1
    %11 = vsyncpa %s10, 0
    %12 = vsyncpa [#allocation6], 0
    %13 = vsyncpa [#allocation9], 0
    %14 = vsyncpa [#allocation4], 0
    %s15 = scalar_lea.sflag [#allocation4], 1
    %16 = vsyncpa %s15, 0
    loop: start=0, step=1, limit=4
    $region2: #{tpu_custom_call.1} parent=1 // loop_pre_header
      _
    $region3: #{tpu_custom_call.1} parent=1 // loop_header
      %s18 = sphi 0, %s22
      %p19 = scmp.ge.s32.totalorder %s18, 4
      %s25 = sphi 0, %s37
      %s26 = sphi 0, %s33
      %s27 = sphi 0, %s25
      %s28 = sphi 0, %s26
      %s29 = sphi 0, %s27
      %s30 = sphi 0, %s28
      %s42 = sphi 0, %s44
      %s45 = sphi 0, %s42
      %s46 = sphi 0, %s45
      %s62 = sphi 0, %s46
      %s66 = sphi 0, %s66
      %s68 = sphi 0, %s66
      %s69 = sphi 0, %s68
      %s83 = sphi 0, %s69
      %s87 = sphi 0, %s87
      %s89 = sphi 0, %s87
      %s90 = sphi 0, %s89
      %s104 = sphi 0, %s90
      %s108 = sphi 0, %s108
      %s110 = sphi 0, %s108
      %s111 = sphi 0, %s110
      %s125 = sphi 0, %s111
      %s133 = sphi 0, %s135
      %s136 = sphi 0, %s133
      %s137 = sphi 0, %s136
      %s153 = sphi 0, %s137
    $region4: #{tpu_custom_call.1} parent=1 // loop_header_branch
      %21 = sbr.rel (%p19) target = $region8
    $region5: #{tpu_custom_call.1} parent=1 // loop_body
      %s23 = ssub.s32 %s18, 1
      %s24 = ssub.s32 %s18, 2
      %s31 = sadd.s32 1, %s26
      %p32 = scmp.ge.s32.totalorder %s31, 1
      %s33 = scalar_select %p32, 0, %s31
      %s34 = sadd.s32 1, %s25
      %s35 = scalar_select %p32, %s34, %s25
      %p36 = scmp.ge.s32.totalorder %s35, 2
      %s37 = scalar_select %p36, 0, %s35
      %s38 = ssub.s32 %s25, %s37
      %s39 = ssub.s32 %s26, %s33
      %s40 = sor.u32 %s38, %s39
      %p41 = scmp.eq.s32.totalorder %s40, 0
      %s43 = sadd.s32 %s42, 1
      %s44 = scalar_select %p41, %s42, %s43
      %p47 = pneg %p41
      %p48 = scmp.eq.s32.totalorder %s18, 1
      %p49 = por %p47, %p48
      %p50 = scmp.ne.s32.totalorder %s42, %s45
      %p51 = scmp.eq.s32.totalorder %s18, 0
      %p52 = por %p50, %p51
      %p53 = scmp.ne.s32.totalorder %s42, %s45
      %p54 = scmp.eq.s32.totalorder %s23, 1
      %p55 = por %p53, %p54
      %p56 = scmp.ne.s32.totalorder %s45, %s46
      %p57 = scmp.eq.s32.totalorder %s23, 0
      %p58 = por %p56, %p57
      %p59 = scmp.ne.s32.totalorder %s45, %s46
      %p60 = scmp.eq.s32.totalorder %s24, 1
      %p61 = por %p59, %p60
      %p63 = scmp.ne.s32.totalorder %s46, %s62
      %p64 = scmp.eq.s32.totalorder %s24, 0
      %p65 = por %p63, %p64
      %s67 = sadd.s32 %s66, 1
      %p70 = scmp.eq.s32.totalorder %s18, 1
      %p71 = scmp.ne.s32.totalorder %s66, %s68
      %p72 = scmp.eq.s32.totalorder %s18, 0
      %p73 = por %p71, %p72
      %p74 = scmp.ne.s32.totalorder %s66, %s68
      %p75 = scmp.eq.s32.totalorder %s23, 1
      %p76 = por %p74, %p75
      %p77 = scmp.ne.s32.totalorder %s68, %s69
      %p78 = scmp.eq.s32.totalorder %s23, 0
      %p79 = por %p77, %p78
      %p80 = scmp.ne.s32.totalorder %s68, %s69
      %p81 = scmp.eq.s32.totalorder %s24, 1
      %p82 = por %p80, %p81
      %p84 = scmp.ne.s32.totalorder %s69, %s83
      %p85 = scmp.eq.s32.totalorder %s24, 0
      %p86 = por %p84, %p85
      %s88 = sadd.s32 %s87, 1
      %p91 = scmp.eq.s32.totalorder %s18, 1
      %p92 = scmp.ne.s32.totalorder %s87, %s89
      %p93 = scmp.eq.s32.totalorder %s18, 0
      %p94 = por %p92, %p93
      %p95 = scmp.ne.s32.totalorder %s87, %s89
      %p96 = scmp.eq.s32.totalorder %s23, 1
      %p97 = por %p95, %p96
      %p98 = scmp.ne.s32.totalorder %s89, %s90
      %p99 = scmp.eq.s32.totalorder %s23, 0
      %p100 = por %p98, %p99
      %p101 = scmp.ne.s32.totalorder %s89, %s90
      %p102 = scmp.eq.s32.totalorder %s24, 1
      %p103 = por %p101, %p102
      %p105 = scmp.ne.s32.totalorder %s90, %s104
      %p106 = scmp.eq.s32.totalorder %s24, 0
      %p107 = por %p105, %p106
      %s109 = sadd.s32 %s108, 1
      %p112 = scmp.eq.s32.totalorder %s18, 1
      %p113 = scmp.ne.s32.totalorder %s108, %s110
      %p114 = scmp.eq.s32.totalorder %s18, 0
      %p115 = por %p113, %p114
      %p116 = scmp.ne.s32.totalorder %s108, %s110
      %p117 = scmp.eq.s32.totalorder %s23, 1
      %p118 = por %p116, %p117
      %p119 = scmp.ne.s32.totalorder %s110, %s111
      %p120 = scmp.eq.s32.totalorder %s23, 0
      %p121 = por %p119, %p120
      %p122 = scmp.ne.s32.totalorder %s110, %s111
      %p123 = scmp.eq.s32.totalorder %s24, 1
      %p124 = por %p122, %p123
      %p126 = scmp.ne.s32.totalorder %s111, %s125
      %p127 = scmp.eq.s32.totalorder %s24, 0
      %p128 = por %p126, %p127
      %s129 = ssub.s32 %s25, %s37
      %s130 = ssub.s32 %s26, %s33
      %s131 = sor.u32 %s129, %s130
      %p132 = scmp.eq.s32.totalorder %s131, 0
      %s134 = sadd.s32 %s133, 1
      %s135 = scalar_select %p132, %s133, %s134
      %p138 = pneg %p132
      %p139 = scmp.eq.s32.totalorder %s18, 1
      %p140 = por %p138, %p139
      %p141 = scmp.ne.s32.totalorder %s133, %s136
      %p142 = scmp.eq.s32.totalorder %s18, 0
      %p143 = por %p141, %p142
      %p144 = scmp.ne.s32.totalorder %s133, %s136
      %p145 = scmp.eq.s32.totalorder %s23, 1
      %p146 = por %p144, %p145
      %p147 = scmp.ne.s32.totalorder %s136, %s137
      %p148 = scmp.eq.s32.totalorder %s23, 0
      %p149 = por %p147, %p148
      %p150 = scmp.ne.s32.totalorder %s136, %s137
      %p151 = scmp.eq.s32.totalorder %s24, 1
      %p152 = por %p150, %p151
      %p154 = scmp.ne.s32.totalorder %s137, %s153
      %p155 = scmp.eq.s32.totalorder %s24, 0
      %p156 = por %p154, %p155
      %p157 = scmp.le.s32.totalorder 1, %s18
      %p158 = scmp.lt.s32.totalorder %s18, 3
      %p159 = pnand %p157, %p158
      %p160 = pneg %p159
      // Predicated region
      $region9: #{tpu_custom_call.1} parent=5 // pred_check
        _
      $region10: #{tpu_custom_call.1} parent=5 // pred_check_branch
        %162 = sbr.rel (%p159) target = $region12
      $region11: #{tpu_custom_call.1} parent=5 // pred_region
        %s163 = ssub.s32 %s18, 1
        // Predicated region
        $region13: #{tpu_custom_call.1} parent=11 // pred_check
          %p164 = pneg %p79
        $region14: #{tpu_custom_call.1} parent=11 // pred_check_branch
          %166 = sbr.rel (%p164) target = $region16
        $region15: #{tpu_custom_call.1} parent=11 // pred_region
          %168 = vsyncadd [#allocation6], 0
          %s170 = sshll.u32 %s1, 4
          %s171 = int_to_ptr.hbm [resolvable:$true] %s170
          %s172 = sshll.u32 [#allocation5], 4
          %s173 = int_to_ptr.vmem [resolvable:$true] %s172
          %175 = dma.hbm_to_vmem [thread:$0]  %s171, 32, %s173, [#allocation6]
        $region16: #{tpu_custom_call.1} parent=11 // pred_fallthru
          _
        // Predicated region
        $region17: #{tpu_custom_call.1} parent=11 // pred_check
          %p176 = pneg %p100
        $region18: #{tpu_custom_call.1} parent=11 // pred_check_branch
          %178 = sbr.rel (%p176) target = $region20
        $region19: #{tpu_custom_call.1} parent=11 // pred_region
          %180 = vsyncadd [#allocation6], 0
          %s182 = sshll.u32 %s2, 4
          %s183 = int_to_ptr.hbm [resolvable:$true] %s182
          %s184 = sshll.u32 [#allocation7], 4
          %s185 = int_to_ptr.vmem [resolvable:$true] %s184
          %187 = dma.hbm_to_vmem [thread:$0]  %s183, 32, %s185, [#allocation6]
        $region20: #{tpu_custom_call.1} parent=11 // pred_fallthru
          _
        // Predicated region
        $region21: #{tpu_custom_call.1} parent=11 // pred_check
          %p188 = pneg %p121
        $region22: #{tpu_custom_call.1} parent=11 // pred_check_branch
          %190 = sbr.rel (%p188) target = $region24
        $region23: #{tpu_custom_call.1} parent=11 // pred_region
          %192 = vsyncadd [#allocation9], 0
          %s193 = sshll.u32 %s3, 4
          %s194 = int_to_ptr.hbm [resolvable:$true] %s193
          %s195 = sshll.u32 [#allocation8], 4
          %s196 = int_to_ptr.vmem [resolvable:$true] %s195
          %201 = dma.hbm_to_vmem [thread:$0]  %s194, 1024, %s196, [#allocation9], 64, 64, 4
        $region24: #{tpu_custom_call.1} parent=11 // pred_fallthru
          _
      $region12: #{tpu_custom_call.1} parent=5 // pred_fallthru
        _
      %p202 = scmp.lt.s32.totalorder %s18, 2
      // Predicated region
      $region25: #{tpu_custom_call.1} parent=5 // pred_check
        %p203 = pneg %p202
      $region26: #{tpu_custom_call.1} parent=5 // pred_check_branch
        %205 = sbr.rel (%p203) target = $region28
      $region27: #{tpu_custom_call.1} parent=5 // pred_region
        // Predicated region
        $region29: #{tpu_custom_call.1} parent=27 // pred_check
          %p206 = pneg %p52
        $region30: #{tpu_custom_call.1} parent=27 // pred_check_branch
          %208 = sbr.rel (%p206) target = $region32
        $region31: #{tpu_custom_call.1} parent=27 // pred_region
          %s209 = sand.u32 %s42, 1
          %s210 = scalar_lea.sflag [#allocation3], %s209
          %s211 = sand.u32 %s42, 1
          %s212 = smul.addr %s211, 128
          %s213 = scalar_lea.vmem [#allocation2], %s212
          %s214 = smul.u32 8, %s26
          %216 = vsyncadd %s210, 0
          %s217 = smul.addr %s214, 4
          %s218 = smul.addr %s25, 32
          %s219 = sadd.s32 %s217, %s218
          %s220 = smul.addr %s219, 4
          %s221 = scalar_lea.hbm %s0, %s220
          %s222 = sshll.u32 %s221, 4
          %s223 = int_to_ptr.hbm [resolvable:$true] %s222
          %s224 = sshll.u32 %s213, 4
          %s225 = int_to_ptr.vmem [resolvable:$true] %s224
          %230 = dma.hbm_to_vmem [thread:$0]  %s223, 2048, %s225, %s210, 128, 128, 8
        $region32: #{tpu_custom_call.1} parent=27 // pred_fallthru
          _
      $region28: #{tpu_custom_call.1} parent=5 // pred_fallthru
        _
      %p231 = scmp.le.s32.totalorder 1, %s18
      %p232 = scmp.lt.s32.totalorder %s18, 3
      %p233 = pnand %p231, %p232
      %p234 = pneg %p233
      // Predicated region
      $region33: #{tpu_custom_call.1} parent=5 // pred_check
        _
      $region34: #{tpu_custom_call.1} parent=5 // pred_check_branch
        %236 = sbr.rel (%p233) target = $region36
      $region35: #{tpu_custom_call.1} parent=5 // pred_region
        %s237 = ssub.s32 %s18, 1
        %s238 = sand.u32 %s45, 1
        %s239 = scalar_lea.sflag [#allocation3], %s238
        %s240 = sand.u32 %s45, 1
        %s241 = smul.addr %s240, 128
        %s242 = scalar_lea.vmem [#allocation2], %s241
        // Predicated region
        $region37: #{tpu_custom_call.1} parent=35 // pred_check
          %p243 = pneg %p58
        $region38: #{tpu_custom_call.1} parent=35 // pred_check_branch
          %245 = sbr.rel (%p243) target = $region40
        $region39: #{tpu_custom_call.1} parent=35 // pred_region
          %247 = dma.done %s239, 2048
        $region40: #{tpu_custom_call.1} parent=35 // pred_fallthru
          _
        // Predicated region
        $region41: #{tpu_custom_call.1} parent=35 // pred_check
          %p248 = pneg %p79
        $region42: #{tpu_custom_call.1} parent=35 // pred_check_branch
          %250 = sbr.rel (%p248) target = $region44
        $region43: #{tpu_custom_call.1} parent=35 // pred_region
          %252 = dma.done [#allocation6], 32
        $region44: #{tpu_custom_call.1} parent=35 // pred_fallthru
          _
        // Predicated region
        $region45: #{tpu_custom_call.1} parent=35 // pred_check
          %p253 = pneg %p100
        $region46: #{tpu_custom_call.1} parent=35 // pred_check_branch
          %255 = sbr.rel (%p253) target = $region48
        $region47: #{tpu_custom_call.1} parent=35 // pred_region
          %257 = dma.done [#allocation6], 32
        $region48: #{tpu_custom_call.1} parent=35 // pred_fallthru
          _
        // Predicated region
        $region49: #{tpu_custom_call.1} parent=35 // pred_check
          %p258 = pneg %p121
        $region50: #{tpu_custom_call.1} parent=35 // pred_check_branch
          %260 = sbr.rel (%p258) target = $region52
        $region51: #{tpu_custom_call.1} parent=35 // pred_region
          %262 = dma.done [#allocation9], 1024
        $region52: #{tpu_custom_call.1} parent=35 // pred_fallthru
          _
        %s263 = sand.u32 %s45, 1
        %s264 = scalar_lea.sflag [#allocation3], %s263
        %s265 = sand.u32 %s45, 1
        %s266 = smul.addr %s265, 128
        %s267 = scalar_lea.vmem [#allocation2], %s266
        %p268 = pneg %p58
        %p269 = pneg %p55
        %p270 = pneg %p79
        %p271 = pneg %p76
        %p272 = pneg %p100
        %p273 = pneg %p97
        %p274 = pneg %p121
        %p275 = pneg %p118
        %p276 = pneg %p149
        %p277 = pneg %p146
        %s278 = sand.u32 %s136, 1
        %s279 = scalar_lea.sflag [#allocation4], %s278
        %s280 = sand.u32 %s136, 1
        %s281 = smul.addr %s280, 32
        %s282 = scalar_lea.vmem [#allocation10], %s281
        %s283 = smul.u32 8, %s28
        %s284 = smul.u32 8, %s28
        %v285 = vld [vmem:[#allocation5] sm:$0x3]
        %v286 = vld [vmem:[#allocation7] sm:$0x3]
        %v287 = vld [vmem:[%s242] sm:$0xff]
        %v288 = vld [vmem:[%s242 + $0x8] sm:$0xff]
        %v289 = vld [vmem:[%s242 + $0x10] sm:$0xff]
        %v290 = vld [vmem:[%s242 + $0x18] sm:$0xff]
        %v291 = vld [vmem:[%s242 + $0x20] sm:$0xff]
        %v292 = vld [vmem:[%s242 + $0x28] sm:$0xff]
        %v293 = vld [vmem:[%s242 + $0x30] sm:$0xff]
        %v294 = vld [vmem:[%s242 + $0x38] sm:$0xff]
        %v295 = vld [vmem:[%s242 + $0x40] sm:$0xff]
        %v296 = vld [vmem:[%s242 + $0x48] sm:$0xff]
        %v297 = vld [vmem:[%s242 + $0x50] sm:$0xff]
        %v298 = vld [vmem:[%s242 + $0x58] sm:$0xff]
        %v299 = vld [vmem:[%s242 + $0x60] sm:$0xff]
        %v300 = vld [vmem:[%s242 + $0x68] sm:$0xff]
        %v301 = vld [vmem:[%s242 + $0x70] sm:$0xff]
        %v302 = vld [vmem:[%s242 + $0x78] sm:$0xff]
        %v303 = vunpack.c.l.bf16 %v287
        %v304 = vunpack.c.h.bf16 %v287
        %v305 = vunpack.c.l.bf16 %v289
        %v306 = vunpack.c.h.bf16 %v289
        %v307 = vunpack.c.l.bf16 %v291
        %v308 = vunpack.c.h.bf16 %v291
        %v309 = vunpack.c.l.bf16 %v293
        %v310 = vunpack.c.h.bf16 %v293
        %v311 = vunpack.c.l.bf16 %v295
        %v312 = vunpack.c.h.bf16 %v295
        %v313 = vunpack.c.l.bf16 %v297
        %v314 = vunpack.c.h.bf16 %v297
        %v315 = vunpack.c.l.bf16 %v299
        %v316 = vunpack.c.h.bf16 %v299
        %v317 = vunpack.c.l.bf16 %v301
        %v318 = vunpack.c.h.bf16 %v301
        %v320 = vperm.slane %v285, 0
        %v321 = vperm.slane %v285, 1
        %v324 = vmul.f32 %v303, %v320
        %v325 = vmul.f32 %v304, %v321
        %v326 = vmul.f32 %v305, %v320
        %v327 = vmul.f32 %v306, %v321
        %v328 = vmul.f32 %v307, %v320
        %v329 = vmul.f32 %v308, %v321
        %v330 = vmul.f32 %v309, %v320
        %v331 = vmul.f32 %v310, %v321
        %v332 = vmul.f32 %v311, %v320
        %v333 = vmul.f32 %v312, %v321
        %v334 = vmul.f32 %v313, %v320
        %v335 = vmul.f32 %v314, %v321
        %v336 = vmul.f32 %v315, %v320
        %v337 = vmul.f32 %v316, %v321
        %v338 = vmul.f32 %v317, %v320
        %v339 = vmul.f32 %v318, %v321
        %v341 = vperm.slane %v286, 0
        %v342 = vperm.slane %v286, 1
        %v345 = vadd.f32 %v324, %v341
        %v346 = vadd.f32 %v325, %v342
        %v347 = vadd.f32 %v326, %v341
        %v348 = vadd.f32 %v327, %v342
        %v349 = vadd.f32 %v328, %v341
        %v350 = vadd.f32 %v329, %v342
        %v351 = vadd.f32 %v330, %v341
        %v352 = vadd.f32 %v331, %v342
        %v353 = vadd.f32 %v332, %v341
        %v354 = vadd.f32 %v333, %v342
        %v355 = vadd.f32 %v334, %v341
        %v356 = vadd.f32 %v335, %v342
        %v357 = vadd.f32 %v336, %v341
        %v358 = vadd.f32 %v337, %v342
        %v359 = vadd.f32 %v338, %v341
        %v360 = vadd.f32 %v339, %v342
        %v361 = vmax.f32 %v345, 0.0
        %v362 = vmax.f32 %v346, 0.0
        %v363 = vmax.f32 %v347, 0.0
        %v364 = vmax.f32 %v348, 0.0
        %v365 = vmax.f32 %v349, 0.0
        %v366 = vmax.f32 %v350, 0.0
        %v367 = vmax.f32 %v351, 0.0
        %v368 = vmax.f32 %v352, 0.0
        %v369 = vmax.f32 %v353, 0.0
        %v370 = vmax.f32 %v354, 0.0
        %v371 = vmax.f32 %v355, 0.0
        %v372 = vmax.f32 %v356, 0.0
        %v373 = vmax.f32 %v357, 0.0
        %v374 = vmax.f32 %v358, 0.0
        %v375 = vmax.f32 %v359, 0.0
        %v376 = vmax.f32 %v360, 0.0
        %v377 = vunpack.c.l.bf16 %v288
        %v378 = vunpack.c.h.bf16 %v288
        %v379 = vunpack.c.l.bf16 %v290
        %v380 = vunpack.c.h.bf16 %v290
        %v381 = vunpack.c.l.bf16 %v292
        %v382 = vunpack.c.h.bf16 %v292
        %v383 = vunpack.c.l.bf16 %v294
        %v384 = vunpack.c.h.bf16 %v294
        %v385 = vunpack.c.l.bf16 %v296
        %v386 = vunpack.c.h.bf16 %v296
        %v387 = vunpack.c.l.bf16 %v298
        %v388 = vunpack.c.h.bf16 %v298
        %v389 = vunpack.c.l.bf16 %v300
        %v390 = vunpack.c.h.bf16 %v300
        %v391 = vunpack.c.l.bf16 %v302
        %v392 = vunpack.c.h.bf16 %v302
        %v393 = vmul.f32 %v377, %v320
        %v394 = vmul.f32 %v378, %v321
        %v395 = vmul.f32 %v379, %v320
        %v396 = vmul.f32 %v380, %v321
        %v397 = vmul.f32 %v381, %v320
        %v398 = vmul.f32 %v382, %v321
        %v399 = vmul.f32 %v383, %v320
        %v400 = vmul.f32 %v384, %v321
        %v401 = vmul.f32 %v385, %v320
        %v402 = vmul.f32 %v386, %v321
        %v403 = vmul.f32 %v387, %v320
        %v404 = vmul.f32 %v388, %v321
        %v405 = vmul.f32 %v389, %v320
        %v406 = vmul.f32 %v390, %v321
        %v407 = vmul.f32 %v391, %v320
        %v408 = vmul.f32 %v392, %v321
        %v409 = vadd.f32 %v393, %v341
        %v410 = vadd.f32 %v394, %v342
        %v411 = vadd.f32 %v395, %v341
        %v412 = vadd.f32 %v396, %v342
        %v413 = vadd.f32 %v397, %v341
        %v414 = vadd.f32 %v398, %v342
        %v415 = vadd.f32 %v399, %v341
        %v416 = vadd.f32 %v400, %v342
        %v417 = vadd.f32 %v401, %v341
        %v418 = vadd.f32 %v402, %v342
        %v419 = vadd.f32 %v403, %v341
        %v420 = vadd.f32 %v404, %v342
        %v421 = vadd.f32 %v405, %v341
        %v422 = vadd.f32 %v406, %v342
        %v423 = vadd.f32 %v407, %v341
        %v424 = vadd.f32 %v408, %v342
        %v425 = vmax.f32 %v409, 0.0
        %v426 = vmax.f32 %v410, 0.0
        %v427 = vmax.f32 %v411, 0.0
        %v428 = vmax.f32 %v412, 0.0
        %v429 = vmax.f32 %v413, 0.0
        %v430 = vmax.f32 %v414, 0.0
        %v431 = vmax.f32 %v415, 0.0
        %v432 = vmax.f32 %v416, 0.0
        %v433 = vmax.f32 %v417, 0.0
        %v434 = vmax.f32 %v418, 0.0
        %v435 = vmax.f32 %v419, 0.0
        %v436 = vmax.f32 %v420, 0.0
        %v437 = vmax.f32 %v421, 0.0
        %v438 = vmax.f32 %v422, 0.0
        %v439 = vmax.f32 %v423, 0.0
        %v440 = vmax.f32 %v424, 0.0
        %v441 = vadd.f32 %v361, %v425
        %v442 = vadd.f32 %v362, %v426
        %v443 = vadd.f32 %v363, %v427
        %v444 = vadd.f32 %v364, %v428
        %v445 = vadd.f32 %v365, %v429
        %v446 = vadd.f32 %v366, %v430
        %v447 = vadd.f32 %v367, %v431
        %v448 = vadd.f32 %v368, %v432
        %v449 = vadd.f32 %v369, %v433
        %v450 = vadd.f32 %v370, %v434
        %v451 = vadd.f32 %v371, %v435
        %v452 = vadd.f32 %v372, %v436
        %v453 = vadd.f32 %v373, %v437
        %v454 = vadd.f32 %v374, %v438
        %v455 = vadd.f32 %v375, %v439
        %v456 = vadd.f32 %v376, %v440
        %v457 = vadd.f32 %v441, %v442
        %v458 = vadd.f32 %v443, %v444
        %v459 = vadd.f32 %v445, %v446
        %v460 = vadd.f32 %v447, %v448
        %v461 = vadd.f32 %v449, %v450
        %v462 = vadd.f32 %v451, %v452
        %v463 = vadd.f32 %v453, %v454
        %v464 = vadd.f32 %v455, %v456
        %v465 = vpack.c.bf16 %v458, %v457
        %v466 = vpack.c.bf16 %v460, %v459
        %v467 = vpack.c.bf16 %v462, %v461
        %v468 = vpack.c.bf16 %v464, %v463
        %v469 = vld [vmem:[#allocation8] sm:$0xf]
        %v470 = vld [vmem:[#allocation8 + $0x4] sm:$0xf]
        %v471 = vld [vmem:[#allocation8 + $0x8] sm:$0xf]
        %v472 = vld [vmem:[#allocation8 + $0xc] sm:$0xf]
        %v473 = vld [vmem:[#allocation8 + $0x10] sm:$0xf]
        %v474 = vld [vmem:[#allocation8 + $0x14] sm:$0xf]
        %v475 = vld [vmem:[#allocation8 + $0x18] sm:$0xf]
        %v476 = vld [vmem:[#allocation8 + $0x1c] sm:$0xf]
        %v477 = vld [vmem:[#allocation8 + $0x20] sm:$0xf]
        %v478 = vld [vmem:[#allocation8 + $0x24] sm:$0xf]
        %v479 = vld [vmem:[#allocation8 + $0x28] sm:$0xf]
        %v480 = vld [vmem:[#allocation8 + $0x2c] sm:$0xf]
        %v481 = vld [vmem:[#allocation8 + $0x30] sm:$0xf]
        %v482 = vld [vmem:[#allocation8 + $0x34] sm:$0xf]
        %v483 = vld [vmem:[#allocation8 + $0x38] sm:$0xf]
        %v484 = vld [vmem:[#allocation8 + $0x3c] sm:$0xf]
        %v501 = vunpack.c.l.b16 %v469
        %v502 = vunpack.c.l.b16 %v470
        %v503 = vunpack.c.l.b16 %v471
        %v504 = vunpack.c.l.b16 %v472
        %v505 = vunpack.c.l.b16 %v473
        %v506 = vunpack.c.l.b16 %v474
        %v507 = vunpack.c.l.b16 %v475
        %v508 = vunpack.c.l.b16 %v476
        %v509 = vunpack.c.l.b16 %v477
        %v510 = vunpack.c.l.b16 %v478
        %v511 = vunpack.c.l.b16 %v479
        %v512 = vunpack.c.l.b16 %v480
        %v513 = vunpack.c.l.b16 %v481
        %v514 = vunpack.c.l.b16 %v482
        %v515 = vunpack.c.l.b16 %v483
        %v516 = vunpack.c.l.b16 %v484
        %v517 = vpack.c.b16 %v502, %v501
        %v518 = vpack.c.b16 %v504, %v503
        %v519 = vpack.c.b16 %v506, %v505
        %v520 = vpack.c.b16 %v508, %v507
        %v521 = vpack.c.b16 %v510, %v509
        %v522 = vpack.c.b16 %v512, %v511
        %v523 = vpack.c.b16 %v514, %v513
        %v524 = vpack.c.b16 %v516, %v515
        %533 = vmatpush.bf16.msra.mxu0 %v524
        %534 = vmatpush.bf16.msra.mxu0 %v523
        %535 = vmatpush.bf16.msra.mxu0 %v522
        %536 = vmatpush.bf16.msra.mxu0 %v521
        %537 = vmatpush.bf16.msra.mxu0 %v520
        %538 = vmatpush.bf16.msra.mxu0 %v519
        %539 = vmatpush.bf16.msra.mxu0 %v518
        %540 = vmatpush.bf16.msra.mxu0 %v517
        %541 = vmatmul.bf16.gmra.mxu0 %v465
        %v542 = vpop.f32.mrf.mxu0
        %v543 = vadd.f32 0.0, %v542
        %v544 = vpop.f32.mrf.mxu0
        %v545 = vadd.f32 0.0, %v544
        %546 = vmatmul.bf16.gmra.mxu0 %v466
        %v547 = vpop.f32.mrf.mxu0
        %v548 = vadd.f32 0.0, %v547
        %v549 = vpop.f32.mrf.mxu0
        %v550 = vadd.f32 0.0, %v549
        %551 = vmatmul.bf16.gmra.mxu0 %v467
        %v552 = vpop.f32.mrf.mxu0
        %v553 = vadd.f32 0.0, %v552
        %v554 = vpop.f32.mrf.mxu0
        %v555 = vadd.f32 0.0, %v554
        %556 = vmatmul.bf16.gmra.mxu0 %v468
        %v557 = vpop.f32.mrf.mxu0
        %v558 = vadd.f32 0.0, %v557
        %v559 = vpop.f32.mrf.mxu0
        %v560 = vadd.f32 0.0, %v559
        %561 = vdwg.mxu0
        %v562 = vpack.c.bf16 %v543, %v543
        %v563 = vpack.c.bf16 %v545, %v545
        %v564 = vpack.c.bf16 %v548, %v548
        %v565 = vpack.c.bf16 %v550, %v550
        %v566 = vpack.c.bf16 %v553, %v553
        %v567 = vpack.c.bf16 %v555, %v555
        %v568 = vpack.c.bf16 %v558, %v558
        %v569 = vpack.c.bf16 %v560, %v560
        %570 = vst [vmem:[%s282] sm:$0xf] %v562
        %571 = vst [vmem:[%s282 + $0x4] sm:$0xf] %v563
        %572 = vst [vmem:[%s282 + $0x8] sm:$0xf] %v564
        %573 = vst [vmem:[%s282 + $0xc] sm:$0xf] %v565
        %574 = vst [vmem:[%s282 + $0x10] sm:$0xf] %v566
        %575 = vst [vmem:[%s282 + $0x14] sm:$0xf] %v567
        %576 = vst [vmem:[%s282 + $0x18] sm:$0xf] %v568
        %577 = vst [vmem:[%s282 + $0x1c] sm:$0xf] %v569
        %s578 = sand.u32 %s136, 1
        %s579 = scalar_lea.sflag [#allocation4], %s578
        %s580 = sand.u32 %s136, 1
        %s581 = smul.addr %s580, 32
        %s582 = scalar_lea.vmem [#allocation10], %s581
        // Predicated region
        $region53: #{tpu_custom_call.1} parent=35 // pred_check
          %p583 = pneg %p146
        $region54: #{tpu_custom_call.1} parent=35 // pred_check_branch
          %585 = sbr.rel (%p583) target = $region56
        $region55: #{tpu_custom_call.1} parent=35 // pred_region
          %s586 = smul.u32 8, %s28
          %588 = vsyncadd %s579, 0
          %s589 = smul.addr %s27, 8
          %s590 = sadd.s32 %s586, %s589
          %s591 = smul.addr %s590, 4
          %s592 = scalar_lea.hbm %s4, %s591
          %s593 = sshll.u32 %s582, 4
          %s594 = int_to_ptr.vmem [resolvable:$true] %s593
          %s595 = sshll.u32 %s592, 4
          %s596 = int_to_ptr.hbm [resolvable:$true] %s595
          %601 = dma.vmem_to_hbm [thread:$0]  %s594, 512, %s596, %s579, 64, 64, 4
        $region56: #{tpu_custom_call.1} parent=35 // pred_fallthru
          _
      $region36: #{tpu_custom_call.1} parent=5 // pred_fallthru
        _
      %p602 = scmp.le.s32.totalorder 2, %s18
      // Predicated region
      $region57: #{tpu_custom_call.1} parent=5 // pred_check
        %p603 = pneg %p602
      $region58: #{tpu_custom_call.1} parent=5 // pred_check_branch
        %605 = sbr.rel (%p603) target = $region60
      $region59: #{tpu_custom_call.1} parent=5 // pred_region
        %s606 = ssub.s32 %s18, 2
        // Predicated region
        $region61: #{tpu_custom_call.1} parent=59 // pred_check
          %p607 = pneg %p152
        $region62: #{tpu_custom_call.1} parent=59 // pred_check_branch
          %609 = sbr.rel (%p607) target = $region64
        $region63: #{tpu_custom_call.1} parent=59 // pred_region
          %s610 = sand.u32 %s137, 1
          %s611 = scalar_lea.sflag [#allocation4], %s610
          %s612 = sand.u32 %s137, 1
          %s613 = smul.addr %s612, 32
          %s614 = scalar_lea.vmem [#allocation10], %s613
          %616 = dma.done %s611, 512
        $region64: #{tpu_custom_call.1} parent=59 // pred_fallthru
          _
      $region60: #{tpu_custom_call.1} parent=5 // pred_fallthru
        _
    $region6: #{tpu_custom_call.1} parent=1 // loop_footer
      %s22 = sadd.s32 1, %s18
    $region7: #{tpu_custom_call.1} parent=1 // loop_footer_branch
      %17 = sbr.rel target = $region3
    $region8: #{tpu_custom_call.1} parent=1 // loop_exit
      _
    %617 = vsyncpa [#allocation3], 1
    %s618 = scalar_lea.sflag [#allocation3], 1
    %619 = vsyncpa %s618, 1
    %620 = vsyncpa [#allocation6], 1
    %621 = vsyncpa [#allocation9], 1
    %622 = vsyncpa [#allocation4], 1
    %s623 = scalar_lea.sflag [#allocation4], 1
    %624 = vsyncpa %s623, 1

</llo_original>
